<compile_context>
chip_gen: v7x
topology: tpu7x:2x2x1
jax: 0.10.0
libtpu: 0.0.40
codegen_flags: <defaults>
</compile_context>

<pallas_src>
import functools

import jax
import jax.numpy as jnp
from jax import lax
from jax.experimental import pallas as pl
from jax.experimental.pallas import tpu as pltpu


def _round_up(x, m):
    return ((x + m - 1) // m) * m


# --------------------------------------------------------------------------- pass 1
def _conv_stats_kernel(p_ref, w_ref, b_ref, y_ref, s_ref, ss_ref, *,
                       dhw_valid, need_mask):
    """Fused dual-scale conv (single matmul) + partial InstanceNorm statistics.

    p_ref : (1, 125*Ci, T)  im2col patches (5x5x5, 'same' pad) for this DHW tile
    w_ref : (Co_p, 125*Ci)  fused weights (conv1 zero-padded into the 5x5x5 taps)
    b_ref : (Co_p, 1)       fused bias (f32)
    y_ref : (1, Co_p, T)    un-normalized conv output (f32 intermediate)
    s_ref : (1, Co_p, 1)    running per-channel sum   (accumulated over DHW tiles)
    ss_ref: (1, Co_p, 1)    running per-channel sumsq (accumulated over DHW tiles)
    """
    t = pl.program_id(1)
    tile = p_ref.shape[-1]

    # conv-as-matmul on the MXU, f32 accumulation regardless of streaming dtype
    y = jnp.dot(w_ref[...], p_ref[0], preferred_element_type=jnp.float32)
    y = y + b_ref[...]                                   # (Co_p, T), f32
    y_ref[0] = y.astype(y_ref.dtype)

    if need_mask:  # mask out DHW-padding columns before accumulating statistics
        col = t * tile + lax.broadcasted_iota(jnp.int32, (1, tile), 1)
        ym = jnp.where(col < dhw_valid, y, 0.0)
    else:
        ym = y

    @pl.when(t == 0)
    def _():
        s_ref[...] = jnp.zeros_like(s_ref)
        ss_ref[...] = jnp.zeros_like(ss_ref)

    s_ref[0] += jnp.sum(ym, axis=1, keepdims=True)
    ss_ref[0] += jnp.sum(ym * ym, axis=1, keepdims=True)


# --------------------------------------------------------------------------- pass 2
def _norm_act_kernel(y_ref, s_ref, ss_ref, o_ref, *, inv_n, eps, neg_slope):
    """InstanceNorm (from precomputed sum/sumsq) + LeakyReLU on one DHW tile."""
    mean = s_ref[0] * inv_n                              # (Co_p, 1)
    var = jnp.maximum(ss_ref[0] * inv_n - mean * mean, 0.0)
    scale = lax.rsqrt(var + eps)
    yn = (y_ref[0] - mean) * scale                       # (Co_p, T)
    o_ref[0] = jnp.where(yn >= 0, yn, neg_slope * yn).astype(o_ref.dtype)


# --------------------------------------------------------------------------- glue
def _im2col_5(x, D, H, W):
    """x: (N, Ci, D, H, W) -> (N, 125*Ci, D*H*W), tap-major / channel-minor rows."""
    N, Ci = x.shape[:2]
    xp = jnp.pad(x, ((0, 0), (0, 0), (2, 2), (2, 2), (2, 2)))
    cols = []
    for kd in range(5):
        for kh in range(5):
            for kw in range(5):
                cols.append(xp[:, :, kd:kd + D, kh:kh + H, kw:kw + W]
                            .reshape(N, Ci, D * H * W))
    return jnp.concatenate(cols, axis=1)


@functools.partial(jax.jit, static_argnames=("eps", "neg_slope", "max_tile"))
def multiscale_block(x, w1, b1, w2, b2, eps=1e-5, neg_slope=0.01, max_tile=None):
    """Pallas implementation of MultiScaleBlock.forward.  x: (N, Cin, D, H, W)."""
    N, Ci, D, H, W = x.shape
    Co2 = w1.shape[0]
    Co = 2 * Co2
    DHW = D * H * W
    cdtype = x.dtype

    # -- fuse conv1 (k3, pad1) and conv2 (k5, pad2) into one 5x5x5 conv
    w1_5 = jnp.zeros((Co2, Ci, 5, 5, 5), w1.dtype).at[:, :, 1:4, 1:4, 1:4].set(w1)
    w_f = jnp.concatenate([w1_5, w2.astype(w1.dtype)], axis=0)        # (Co, Ci, 5,5,5)
    b_f = jnp.concatenate([b1, b2], axis=0).astype(jnp.float32)       # (Co,)

    # -- pad output channels to a sublane-friendly multiple of 8
    Co_p = max(8, _round_up(Co, 8))
    if Co_p != Co:
        w_f = jnp.pad(w_f, ((0, Co_p - Co), (0, 0), (0, 0), (0, 0), (0, 0)))
        b_f = jnp.pad(b_f, ((0, Co_p - Co),))

    # column index = ((kd*5 + kh)*5 + kw) * Ci + ci  -> matches im2col row order
    w_mat = jnp.transpose(w_f, (2, 3, 4, 1, 0)).reshape(125 * Ci, Co_p).T
    w_mat = w_mat.astype(cdtype)                                      # (Co_p, 125*Ci)
    b_mat = b_f.reshape(Co_p, 1)                                      # f32

    # -- im2col (5x5x5 only; the 3x3x3 branch rides along as zero taps)
    p5 = _im2col_5(x, D, H, W).astype(cdtype)                         # (N, 125*Ci, DHW)

    # -- DHW tile: largest multiple of 128 keeping the double-buffered stream in VMEM
    in_bytes = jnp.dtype(cdtype).itemsize
    per_lane = 2 * (125 * Ci * in_bytes + Co_p * 4 + Co_p * in_bytes)
    tile = (16 * 1024 * 1024) // per_lane
    tile = max(128, min(8192, (tile // 128) * 128))
    if max_tile is not None:
        tile = max(128, min(tile, (max_tile // 128) * 128))
    dhw_p = _round_up(DHW, 128)
    if dhw_p <= tile:
        tile = dhw_p
    dhw_p = _round_up(dhw_p, tile)
    if dhw_p != DHW:
        p5 = jnp.pad(p5, ((0, 0), (0, 0), (0, dhw_p - DHW)))
    n_t = dhw_p // tile

    cparams1 = pltpu.CompilerParams(
        dimension_semantics=("parallel", "arbitrary"),
        vmem_limit_bytes=32 * 1024 * 1024)
    cparams2 = pltpu.CompilerParams(
        dimension_semantics=("parallel", "parallel"),
        vmem_limit_bytes=32 * 1024 * 1024)

    # ---- pass 1: conv (one fused matmul) + per-channel sum / sumsq over DHW tiles
    y_conv, s_sum, s_ssq = pl.pallas_call(
        functools.partial(_conv_stats_kernel, dhw_valid=DHW,
                          need_mask=(dhw_p != DHW)),
        grid=(N, n_t),
        in_specs=[
            pl.BlockSpec((1, 125 * Ci, tile), lambda n, t: (n, 0, t)),
            pl.BlockSpec((Co_p, 125 * Ci), lambda n, t: (0, 0)),
            pl.BlockSpec((Co_p, 1), lambda n, t: (0, 0)),
        ],
        out_specs=[
            pl.BlockSpec((1, Co_p, tile), lambda n, t: (n, 0, t)),
            pl.BlockSpec((1, Co_p, 1), lambda n, t: (n, 0, 0)),
            pl.BlockSpec((1, Co_p, 1), lambda n, t: (n, 0, 0)),
        ],
        out_shape=[
            jax.ShapeDtypeStruct((N, Co_p, dhw_p), jnp.float32),
            jax.ShapeDtypeStruct((N, Co_p, 1), jnp.float32),
            jax.ShapeDtypeStruct((N, Co_p, 1), jnp.float32),
        ],
        compiler_params=cparams1,
    )(p5, w_mat, b_mat)

    # ---- pass 2: normalize + LeakyReLU (fully parallel)
    out_p = pl.pallas_call(
        functools.partial(_norm_act_kernel, inv_n=1.0 / DHW, eps=eps,
                          neg_slope=neg_slope),
        grid=(N, n_t),
        in_specs=[
            pl.BlockSpec((1, Co_p, tile), lambda n, t: (n, 0, t)),
            pl.BlockSpec((1, Co_p, 1), lambda n, t: (n, 0, 0)),
            pl.BlockSpec((1, Co_p, 1), lambda n, t: (n, 0, 0)),
        ],
        out_specs=pl.BlockSpec((1, Co_p, tile), lambda n, t: (n, 0, t)),
        out_shape=jax.ShapeDtypeStruct((N, Co_p, dhw_p), cdtype),
        compiler_params=cparams2,
    )(y_conv, s_sum, s_ssq)

    return out_p[:, :Co, :DHW].reshape(N, Co, D, H, W)


# --------------------------------------------------------------------------- reference
def _reference_forward(x, w1, b1, w2, b2, eps=1e-5, neg_slope=0.01):
    """Pure-JAX reference matching the PyTorch module semantics."""
    dn = ("NCDHW", "OIDHW", "NCDHW")
    y1 = jax.lax.conv_general_dilated(
        x, w1, (1, 1, 1), [(1, 1)] * 3,
        dimension_numbers=jax.lax.conv_dimension_numbers(x.shape, w1.shape, dn))
    y1 = y1 + b1[None, :, None, None, None]
    y2 = jax.lax.conv_general_dilated(
        x, w2, (1, 1, 1), [(2, 2)] * 3,
        dimension_numbers=jax.lax.conv_dimension_numbers(x.shape, w2.shape, dn))
    y2 = y2 + b2[None, :, None, None, None]
    y = jnp.concatenate([y1, y2], axis=1)
    mean = y.mean(axis=(2, 3, 4), keepdims=True)
    var = ((y - mean) ** 2).mean(axis=(2, 3, 4), keepdims=True)
    yn = (y - mean) * jax.lax.rsqrt(var + eps)
    return jnp.where(yn >= 0, yn, neg_slope * yn)


if __name__ == "__main__":
    key = jax.random.PRNGKey(0)

    def make_params(k, ci, co):
        k1, k2, k3, k4 = jax.random.split(k, 4)
        f1 = float(ci * 27) ** 0.5
        f2 = float(ci * 125) ** 0.5
        w1 = jax.random.uniform(k1, (co // 2, ci, 3, 3, 3), jnp.float32, -1., 1.) / f1
        b1 = jax.random.uniform(k2, (co // 2,), jnp.float32, -1., 1.) / f1
        w2 = jax.random.uniform(k3, (co // 2, ci, 5, 5, 5), jnp.float32, -1., 1.) / f2
        b2 = jax.random.uniform(k4, (co // 2,), jnp.float32, -1., 1.) / f2
        return w1, b1, w2, b2

    # --- test 1: f32, Co != 2*Ci (exercises channel padding + layout fix)
    N, Ci, Co, D, H, W = 2, 4, 12, 8, 8, 8
    kx, kp, kr = jax.random.split(key, 3)
    x = jax.random.normal(kx, (N, Ci, D, H, W), jnp.float32)
    w1, b1, w2, b2 = make_params(kp, Ci, Co)
    out = jax.block_until_ready(multiscale_block(x, w1, b1, w2, b2))
    ref = jax.block_until_ready(_reference_forward(x, w1, b1, w2, b2))
    assert out.shape == (N, Co, D, H, W), out.shape
    err1 = float(jnp.max(jnp.abs(out - ref)))
    assert err1 < 1e-3, f"f32 max abs err too large: {err1}"

    # --- test 2: multi-tile DHW with lane-padding mask (odd spatial), f32
    kx2, kp2 = jax.random.split(kr)
    x2 = jax.random.normal(kx2, (1, 3, 7, 7, 7), jnp.float32)
    p2 = make_params(kp2, 3, 8)
    out2 = jax.block_until_ready(multiscale_block(x2, *p2, max_tile=128))
    ref2 = jax.block_until_ready(_reference_forward(x2, *p2))
    err2 = float(jnp.max(jnp.abs(out2 - ref2)))
    assert err2 < 1e-3, f"tiled f32 max abs err too large: {err2}"

    # --- test 3: bf16 streaming (f32 accumulation / norm), loose tolerance
    xb = x.astype(jnp.bfloat16)
    w1b, w2b = w1.astype(jnp.bfloat16), w2.astype(jnp.bfloat16)
    outb = jax.block_until_ready(multiscale_block(xb, w1b, b1, w2b, b2))
    refb = jax.block_until_ready(_reference_forward(
        xb.astype(jnp.float32), w1b.astype(jnp.float32), b1,
        w2b.astype(jnp.float32), b2))
    errb = float(jnp.max(jnp.abs(outb.astype(jnp.float32) - refb)))
    assert errb < 5e-2, f"bf16 max abs err too large: {errb}"

    print("KERNEL_OK")
</pallas_src>

<mosaic_0001>
module attributes {stable_mosaic.version = 11 : i64} {
  func.func @_conv_stats_kernel(%arg0: i32, %arg1: i32, %arg2: memref<1x500x512xf32, #tpu.memory_space<vmem>>, %arg3: memref<16x500xf32, #tpu.memory_space<vmem>>, %arg4: memref<16x1xf32, #tpu.memory_space<vmem>>, %arg5: memref<1x16x512xf32, #tpu.memory_space<vmem>>, %arg6: memref<1x16x1xf32, #tpu.memory_space<vmem>>, %arg7: memref<1x16x1xf32, #tpu.memory_space<vmem>>) attributes {dimension_semantics = [#tpu.dimension_semantics<parallel>, #tpu.dimension_semantics<arbitrary>], iteration_bounds = array<i64: 2, 1>, scalar_prefetch = 0 : i64, scratch_operands = 0 : i64, tpu.core_type = #tpu.core_type<tc>, window_params = [{transform_indices = @transform_0, window_bounds = array<i64: 1, 500, 512>}, {pipeline_mode = #tpu.pipeline_mode<synchronous>, transform_indices = @transform_1, window_bounds = array<i64: 16, 500>}, {pipeline_mode = #tpu.pipeline_mode<synchronous>, transform_indices = @transform_2, window_bounds = array<i64: 16, 1>}, {transform_indices = @transform_3, window_bounds = array<i64: 1, 16, 512>}, {transform_indices = @transform_4, window_bounds = array<i64: 1, 16, 1>}, {transform_indices = @transform_5, window_bounds = array<i64: 1, 16, 1>}]} {
    %c0 = arith.constant 0 : index
    %c0_0 = arith.constant 0 : index
    %0 = vector.load %arg3[%c0, %c0_0] : memref<16x500xf32, #tpu.memory_space<vmem>>, vector<16x500xf32>
    %c0_1 = arith.constant 0 : index
    %c0_2 = arith.constant 0 : index
    %c0_3 = arith.constant 0 : index
    %1 = vector.load %arg2[%c0_1, %c0_2, %c0_3] : memref<1x500x512xf32, #tpu.memory_space<vmem>>, vector<1x500x512xf32>
    %2 = vector.shape_cast %1 : vector<1x500x512xf32> to vector<500x512xf32>
    %cst = arith.constant dense<0.000000e+00> : vector<16x512xf32>
    %3 = tpu.matmul %0, %2, %cst {dimension_numbers = #tpu.dot_dimension_numbers<[1], [0], [0], [1], [0, 0, 1, 1], [], []>} : vector<16x500xf32>, vector<500x512xf32>, vector<16x512xf32> -> vector<16x512xf32>
    %c0_4 = arith.constant 0 : index
    %c0_5 = arith.constant 0 : index
    %4 = vector.load %arg4[%c0_4, %c0_5] : memref<16x1xf32, #tpu.memory_space<vmem>>, vector<16x1xf32>
    %5 = vector.broadcast %4 : vector<16x1xf32> to vector<16x512xf32>
    %6 = arith.addf %3, %5 : vector<16x512xf32>
    %c0_6 = arith.constant 0 : index
    %c0_7 = arith.constant 0 : index
    %c0_8 = arith.constant 0 : index
    %7 = vector.load %arg5[%c0_6, %c0_7, %c0_8] : memref<1x16x512xf32, #tpu.memory_space<vmem>>, vector<1x16x512xf32>
    %8 = vector.shape_cast %7 : vector<1x16x512xf32> to vector<16x512xf32>
    %9 = vector.shape_cast %6 : vector<16x512xf32> to vector<1x16x512xf32>
    tpu.vector_store %arg5[%c0_6, %c0_7, %c0_8], %9 {strides = array<i32>} : memref<1x16x512xf32, #tpu.memory_space<vmem>>, vector<1x16x512xf32>,
    %c0_i32 = arith.constant 0 : i32
    %10 = arith.cmpi eq, %arg1, %c0_i32 : i32
    %11 = arith.extui %10 : i1 to i32
    %c0_i32_9 = arith.constant 0 : i32
    %12 = arith.cmpi ne, %11, %c0_i32_9 : i32
    scf.if %12 {
      %cst_24 = arith.constant 0.000000e+00 : f32
      %30 = vector.broadcast %cst_24 : f32 to vector<1x16x1xf32>
      %c0_25 = arith.constant 0 : index
      %c0_26 = arith.constant 0 : index
      %c0_27 = arith.constant 0 : index
      %31 = vector.load %arg6[%c0_25, %c0_26, %c0_27] : memref<1x16x1xf32, #tpu.memory_space<vmem>>, vector<1x16x1xf32>
      tpu.vector_store %arg6[%c0_25, %c0_26, %c0_27], %30 {strides = array<i32>} : memref<1x16x1xf32, #tpu.memory_space<vmem>>, vector<1x16x1xf32>,
      %cst_28 = arith.constant 0.000000e+00 : f32
      %32 = vector.broadcast %cst_28 : f32 to vector<1x16x1xf32>
      %c0_29 = arith.constant 0 : index
      %c0_30 = arith.constant 0 : index
      %c0_31 = arith.constant 0 : index
      %33 = vector.load %arg7[%c0_29, %c0_30, %c0_31] : memref<1x16x1xf32, #tpu.memory_space<vmem>>, vector<1x16x1xf32>
      tpu.vector_store %arg7[%c0_29, %c0_30, %c0_31], %32 {strides = array<i32>} : memref<1x16x1xf32, #tpu.memory_space<vmem>>, vector<1x16x1xf32>,
    } else {
    }
    %c0_10 = arith.constant 0 : index
    %c0_11 = arith.constant 0 : index
    %c0_12 = arith.constant 0 : index
    %13 = vector.load %arg6[%c0_10, %c0_11, %c0_12] : memref<1x16x1xf32, #tpu.memory_space<vmem>>, vector<1x16x1xf32>
    %14 = vector.shape_cast %13 : vector<1x16x1xf32> to vector<16x1xf32>
    %cst_13 = arith.constant dense<0.000000e+00> : vector<16xf32>
    %15 = vector.multi_reduction <add>, %6, %cst_13 [1] : vector<16x512xf32> to vector<16xf32>
    %16 = vector.shape_cast %15 : vector<16xf32> to vector<16x1xf32>
    %17 = arith.addf %14, %16 : vector<16x1xf32>
    %c0_14 = arith.constant 0 : index
    %c0_15 = arith.constant 0 : index
    %c0_16 = arith.constant 0 : index
    %18 = vector.load %arg6[%c0_14, %c0_15, %c0_16] : memref<1x16x1xf32, #tpu.memory_space<vmem>>, vector<1x16x1xf32>
    %19 = vector.shape_cast %18 : vector<1x16x1xf32> to vector<16x1xf32>
    %20 = vector.shape_cast %17 : vector<16x1xf32> to vector<1x16x1xf32>
    tpu.vector_store %arg6[%c0_14, %c0_15, %c0_16], %20 {strides = array<i32>} : memref<1x16x1xf32, #tpu.memory_space<vmem>>, vector<1x16x1xf32>,
    %c0_17 = arith.constant 0 : index
    %c0_18 = arith.constant 0 : index
    %c0_19 = arith.constant 0 : index
    %21 = vector.load %arg7[%c0_17, %c0_18, %c0_19] : memref<1x16x1xf32, #tpu.memory_space<vmem>>, vector<1x16x1xf32>
    %22 = vector.shape_cast %21 : vector<1x16x1xf32> to vector<16x1xf32>
    %23 = arith.mulf %6, %6 : vector<16x512xf32>
    %cst_20 = arith.constant dense<0.000000e+00> : vector<16xf32>
    %24 = vector.multi_reduction <add>, %23, %cst_20 [1] : vector<16x512xf32> to vector<16xf32>
    %25 = vector.shape_cast %24 : vector<16xf32> to vector<16x1xf32>
    %26 = arith.addf %22, %25 : vector<16x1xf32>
    %c0_21 = arith.constant 0 : index
    %c0_22 = arith.constant 0 : index
    %c0_23 = arith.constant 0 : index
    %27 = vector.load %arg7[%c0_21, %c0_22, %c0_23] : memref<1x16x1xf32, #tpu.memory_space<vmem>>, vector<1x16x1xf32>
    %28 = vector.shape_cast %27 : vector<1x16x1xf32> to vector<16x1xf32>
    %29 = vector.shape_cast %26 : vector<16x1xf32> to vector<1x16x1xf32>
    tpu.vector_store %arg7[%c0_21, %c0_22, %c0_23], %29 {strides = array<i32>} : memref<1x16x1xf32, #tpu.memory_space<vmem>>, vector<1x16x1xf32>,
    return
  }
  func.func @transform_0(%arg0: i32, %arg1: i32) -> (i32, i32, i32) {
    %c0_i32 = arith.constant 0 : i32
    %c0_i32_0 = arith.constant 0 : i32
    return %arg0, %c0_i32, %arg1 : i32, i32, i32
  }
  func.func @transform_1(%arg0: i32, %arg1: i32) -> (i32, i32) {
    %c0_i32 = arith.constant 0 : i32
    %c0_i32_0 = arith.constant 0 : i32
    %c0_i32_1 = arith.constant 0 : i32
    return %c0_i32, %c0_i32_0 : i32, i32
  }
  func.func @transform_2(%arg0: i32, %arg1: i32) -> (i32, i32) {
    %c0_i32 = arith.constant 0 : i32
    %c0_i32_0 = arith.constant 0 : i32
    %c0_i32_1 = arith.constant 0 : i32
    return %c0_i32, %c0_i32_0 : i32, i32
  }
  func.func @transform_3(%arg0: i32, %arg1: i32) -> (i32, i32, i32) {
    %c0_i32 = arith.constant 0 : i32
    %c0_i32_0 = arith.constant 0 : i32
    return %arg0, %c0_i32, %arg1 : i32, i32, i32
  }
  func.func @transform_4(%arg0: i32, %arg1: i32) -> (i32, i32, i32) {
    %c0_i32 = arith.constant 0 : i32
    %c0_i32_0 = arith.constant 0 : i32
    %c0_i32_1 = arith.constant 0 : i32
    return %arg0, %c0_i32, %c0_i32_0 : i32, i32, i32
  }
  func.func @transform_5(%arg0: i32, %arg1: i32) -> (i32, i32, i32) {
    %c0_i32 = arith.constant 0 : i32
    %c0_i32_0 = arith.constant 0 : i32
    %c0_i32_1 = arith.constant 0 : i32
    return %arg0, %c0_i32, %c0_i32_0 : i32, i32, i32
  }
}

module attributes {stable_mosaic.version = 11 : i64} {
  func.func @_norm_act_kernel(%arg0: i32, %arg1: i32, %arg2: memref<1x16x512xf32, #tpu.memory_space<vmem>>, %arg3: memref<1x16x1xf32, #tpu.memory_space<vmem>>, %arg4: memref<1x16x1xf32, #tpu.memory_space<vmem>>, %arg5: memref<1x16x512xf32, #tpu.memory_space<vmem>>) attributes {dimension_semantics = [#tpu.dimension_semantics<parallel>, #tpu.dimension_semantics<parallel>], iteration_bounds = array<i64: 2, 1>, scalar_prefetch = 0 : i64, scratch_operands = 0 : i64, tpu.core_type = #tpu.core_type<tc>, window_params = [{transform_indices = @transform_0, window_bounds = array<i64: 1, 16, 512>}, {transform_indices = @transform_1, window_bounds = array<i64: 1, 16, 1>}, {transform_indices = @transform_2, window_bounds = array<i64: 1, 16, 1>}, {transform_indices = @transform_3, window_bounds = array<i64: 1, 16, 512>}]} {
    %c0 = arith.constant 0 : index
    %c0_0 = arith.constant 0 : index
    %c0_1 = arith.constant 0 : index
    %0 = vector.load %arg3[%c0, %c0_0, %c0_1] : memref<1x16x1xf32, #tpu.memory_space<vmem>>, vector<1x16x1xf32>
    %1 = vector.shape_cast %0 : vector<1x16x1xf32> to vector<16x1xf32>
    %cst = arith.constant 0.001953125 : f32
    %2 = vector.broadcast %cst : f32 to vector<16x1xf32>
    %3 = arith.mulf %1, %2 : vector<16x1xf32>
    %c0_2 = arith.constant 0 : index
    %c0_3 = arith.constant 0 : index
    %c0_4 = arith.constant 0 : index
    %4 = vector.load %arg4[%c0_2, %c0_3, %c0_4] : memref<1x16x1xf32, #tpu.memory_space<vmem>>, vector<1x16x1xf32>
    %5 = vector.shape_cast %4 : vector<1x16x1xf32> to vector<16x1xf32>
    %cst_5 = arith.constant 0.001953125 : f32
    %6 = vector.broadcast %cst_5 : f32 to vector<16x1xf32>
    %7 = arith.mulf %5, %6 : vector<16x1xf32>
    %8 = arith.mulf %3, %3 : vector<16x1xf32>
    %9 = arith.subf %7, %8 : vector<16x1xf32>
    %cst_6 = arith.constant 0.000000e+00 : f32
    %10 = vector.broadcast %cst_6 : f32 to vector<16x1xf32>
    %11 = arith.maximumf %9, %10 : vector<16x1xf32>
    %cst_7 = arith.constant 9.99999974E-6 : f32
    %12 = vector.broadcast %cst_7 : f32 to vector<16x1xf32>
    %13 = arith.addf %11, %12 : vector<16x1xf32>
    %14 = math.rsqrt %13 : vector<16x1xf32>
    %c0_8 = arith.constant 0 : index
    %c0_9 = arith.constant 0 : index
    %c0_10 = arith.constant 0 : index
    %15 = vector.load %arg2[%c0_8, %c0_9, %c0_10] : memref<1x16x512xf32, #tpu.memory_space<vmem>>, vector<1x16x512xf32>
    %16 = vector.shape_cast %15 : vector<1x16x512xf32> to vector<16x512xf32>
    %17 = vector.broadcast %3 : vector<16x1xf32> to vector<16x512xf32>
    %18 = arith.subf %16, %17 : vector<16x512xf32>
    %19 = vector.broadcast %14 : vector<16x1xf32> to vector<16x512xf32>
    %20 = arith.mulf %18, %19 : vector<16x512xf32>
    %cst_11 = arith.constant 0.000000e+00 : f32
    %21 = vector.broadcast %cst_11 : f32 to vector<16x512xf32>
    %22 = arith.cmpf oge, %20, %21 : vector<16x512xf32>
    %cst_12 = arith.constant 0.00999999977 : f32
    %23 = vector.broadcast %cst_12 : f32 to vector<16x512xf32>
    %24 = arith.mulf %23, %20 : vector<16x512xf32>
    %25 = arith.select %22, %20, %24 : vector<16x512xi1>, vector<16x512xf32>
    %c0_13 = arith.constant 0 : index
    %c0_14 = arith.constant 0 : index
    %c0_15 = arith.constant 0 : index
    %26 = vector.load %arg5[%c0_13, %c0_14, %c0_15] : memref<1x16x512xf32, #tpu.memory_space<vmem>>, vector<1x16x512xf32>
    %27 = vector.shape_cast %26 : vector<1x16x512xf32> to vector<16x512xf32>
    %28 = vector.shape_cast %25 : vector<16x512xf32> to vector<1x16x512xf32>
    tpu.vector_store %arg5[%c0_13, %c0_14, %c0_15], %28 {strides = array<i32>} : memref<1x16x512xf32, #tpu.memory_space<vmem>>, vector<1x16x512xf32>,
    return
  }
  func.func @transform_0(%arg0: i32, %arg1: i32) -> (i32, i32, i32) {
    %c0_i32 = arith.constant 0 : i32
    %c0_i32_0 = arith.constant 0 : i32
    return %arg0, %c0_i32, %arg1 : i32, i32, i32
  }
  func.func @transform_1(%arg0: i32, %arg1: i32) -> (i32, i32, i32) {
    %c0_i32 = arith.constant 0 : i32
    %c0_i32_0 = arith.constant 0 : i32
    %c0_i32_1 = arith.constant 0 : i32
    return %arg0, %c0_i32, %c0_i32_0 : i32, i32, i32
  }
  func.func @transform_2(%arg0: i32, %arg1: i32) -> (i32, i32, i32) {
    %c0_i32 = arith.constant 0 : i32
    %c0_i32_0 = arith.constant 0 : i32
    %c0_i32_1 = arith.constant 0 : i32
    return %arg0, %c0_i32, %c0_i32_0 : i32, i32, i32
  }
  func.func @transform_3(%arg0: i32, %arg1: i32) -> (i32, i32, i32) {
    %c0_i32 = arith.constant 0 : i32
    %c0_i32_0 = arith.constant 0 : i32
    return %arg0, %c0_i32, %arg1 : i32, i32, i32
  }
}

</mosaic_0001>

<llo_original>
// kernel: multiscale_block.2
$region0: #{multiscale_block.2}
  #allocation0 [shape = 'u32[]', space=smem, size = 0x4, offset = 0x4, fixed_abs, tag = 'smem constant byte address 0x4 - core index']
  #allocation1 [shape = 'u32[144,128]{1,0:T(1,128)}', space=vmem, size = 0x12000, scoped, tag = 'internal scratch']
  %s0 = inlined_call_operand.vmem [shape: f32[2,500,512], index: 0, kind: input, shape index: {}]
  %s1 = inlined_call_operand.vmem [shape: f32[16,500], index: 1, kind: input, shape index: {}]
  %s2 = inlined_call_operand.vmem [shape: f32[16,1], index: 2, kind: input, shape index: {}]
  %s3 = inlined_call_operand.vmem [shape: f32[2,16,512], index: 3, kind: output, shape index: {0}]
  %s4 = inlined_call_operand.vmem [shape: f32[2,16,1], index: 4, kind: output, shape index: {1}]
  %s5 = inlined_call_operand.vmem [shape: f32[2,16,1], index: 5, kind: output, shape index: {2}]
  %6 = xla_tuple %s3, %s4, %s5
  %s7 = sld [smem:[#allocation0]]
  $region65: #{multiscale_block.2} parent=0
    _
  %s9 = ssub.s32 1, %s7
  %s10 = scalar_select 0, %s9, %s7
  loop: start=0, step=1, limit=4
  $region2: #{multiscale_block.2} parent=0 // loop_pre_header
    _
  $region3: #{multiscale_block.2} parent=0 // loop_header
    %s12 = sphi 0, %s16
    %p13 = scmp.ge.s32.totalorder %s12, 4
    %s19 = sphi 0, %s31
    %s20 = sphi 0, %s27
    %s21 = sphi 0, %s19
    %s22 = sphi 0, %s20
    %s23 = sphi 0, %s21
    %s24 = sphi 0, %s22
    %s36 = sphi 0, %s38
    %s39 = sphi 0, %s36
    %s40 = sphi 0, %s39
    %s56 = sphi 0, %s40
    %s60 = sphi 0, %s60
    %s62 = sphi 0, %s60
    %s63 = sphi 0, %s62
    %s77 = sphi 0, %s63
    %s81 = sphi 0, %s81
    %s83 = sphi 0, %s81
    %s84 = sphi 0, %s83
    %s98 = sphi 0, %s84
    %s106 = sphi 0, %s108
    %s109 = sphi 0, %s106
    %s110 = sphi 0, %s109
    %s126 = sphi 0, %s110
    %s132 = sphi 0, %s134
    %s135 = sphi 0, %s132
    %s136 = sphi 0, %s135
    %s152 = sphi 0, %s136
    %s158 = sphi 0, %s160
    %s161 = sphi 0, %s158
    %s162 = sphi 0, %s161
    %s178 = sphi 0, %s162
  $region4: #{multiscale_block.2} parent=0 // loop_header_branch
    %15 = sbr.rel (%p13) target = $region8
  $region5: #{multiscale_block.2} parent=0 // loop_body
    %s17 = ssub.s32 %s12, 1
    %s18 = ssub.s32 %s12, 2
    %s25 = sadd.s32 1, %s20
    %p26 = scmp.ge.s32.totalorder %s25, 1
    %s27 = scalar_select %p26, 0, %s25
    %s28 = sadd.s32 1, %s19
    %s29 = scalar_select %p26, %s28, %s19
    %p30 = scmp.ge.s32.totalorder %s29, 2
    %s31 = scalar_select %p30, 0, %s29
    %s32 = ssub.s32 %s19, %s31
    %s33 = ssub.s32 %s20, %s27
    %s34 = sor.u32 %s32, %s33
    %p35 = scmp.eq.s32.totalorder %s34, 0
    %s37 = sadd.s32 %s36, 1
    %s38 = scalar_select %p35, %s36, %s37
    %p41 = pneg %p35
    %p42 = scmp.eq.s32.totalorder %s12, 1
    %p43 = por %p41, %p42
    %p44 = scmp.ne.s32.totalorder %s36, %s39
    %p45 = scmp.eq.s32.totalorder %s12, 0
    %p46 = por %p44, %p45
    %p47 = scmp.ne.s32.totalorder %s36, %s39
    %p48 = scmp.eq.s32.totalorder %s17, 1
    %p49 = por %p47, %p48
    %p50 = scmp.ne.s32.totalorder %s39, %s40
    %p51 = scmp.eq.s32.totalorder %s17, 0
    %p52 = por %p50, %p51
    %p53 = scmp.ne.s32.totalorder %s39, %s40
    %p54 = scmp.eq.s32.totalorder %s18, 1
    %p55 = por %p53, %p54
    %p57 = scmp.ne.s32.totalorder %s40, %s56
    %p58 = scmp.eq.s32.totalorder %s18, 0
    %p59 = por %p57, %p58
    %s61 = sadd.s32 %s60, 1
    %p64 = scmp.eq.s32.totalorder %s12, 1
    %p65 = scmp.ne.s32.totalorder %s60, %s62
    %p66 = scmp.eq.s32.totalorder %s12, 0
    %p67 = por %p65, %p66
    %p68 = scmp.ne.s32.totalorder %s60, %s62
    %p69 = scmp.eq.s32.totalorder %s17, 1
    %p70 = por %p68, %p69
    %p71 = scmp.ne.s32.totalorder %s62, %s63
    %p72 = scmp.eq.s32.totalorder %s17, 0
    %p73 = por %p71, %p72
    %p74 = scmp.ne.s32.totalorder %s62, %s63
    %p75 = scmp.eq.s32.totalorder %s18, 1
    %p76 = por %p74, %p75
    %p78 = scmp.ne.s32.totalorder %s63, %s77
    %p79 = scmp.eq.s32.totalorder %s18, 0
    %p80 = por %p78, %p79
    %s82 = sadd.s32 %s81, 1
    %p85 = scmp.eq.s32.totalorder %s12, 1
    %p86 = scmp.ne.s32.totalorder %s81, %s83
    %p87 = scmp.eq.s32.totalorder %s12, 0
    %p88 = por %p86, %p87
    %p89 = scmp.ne.s32.totalorder %s81, %s83
    %p90 = scmp.eq.s32.totalorder %s17, 1
    %p91 = por %p89, %p90
    %p92 = scmp.ne.s32.totalorder %s83, %s84
    %p93 = scmp.eq.s32.totalorder %s17, 0
    %p94 = por %p92, %p93
    %p95 = scmp.ne.s32.totalorder %s83, %s84
    %p96 = scmp.eq.s32.totalorder %s18, 1
    %p97 = por %p95, %p96
    %p99 = scmp.ne.s32.totalorder %s84, %s98
    %p100 = scmp.eq.s32.totalorder %s18, 0
    %p101 = por %p99, %p100
    %s102 = ssub.s32 %s19, %s31
    %s103 = ssub.s32 %s20, %s27
    %s104 = sor.u32 %s102, %s103
    %p105 = scmp.eq.s32.totalorder %s104, 0
    %s107 = sadd.s32 %s106, 1
    %s108 = scalar_select %p105, %s106, %s107
    %p111 = pneg %p105
    %p112 = scmp.eq.s32.totalorder %s12, 1
    %p113 = por %p111, %p112
    %p114 = scmp.ne.s32.totalorder %s106, %s109
    %p115 = scmp.eq.s32.totalorder %s12, 0
    %p116 = por %p114, %p115
    %p117 = scmp.ne.s32.totalorder %s106, %s109
    %p118 = scmp.eq.s32.totalorder %s17, 1
    %p119 = por %p117, %p118
    %p120 = scmp.ne.s32.totalorder %s109, %s110
    %p121 = scmp.eq.s32.totalorder %s17, 0
    %p122 = por %p120, %p121
    %p123 = scmp.ne.s32.totalorder %s109, %s110
    %p124 = scmp.eq.s32.totalorder %s18, 1
    %p125 = por %p123, %p124
    %p127 = scmp.ne.s32.totalorder %s110, %s126
    %p128 = scmp.eq.s32.totalorder %s18, 0
    %p129 = por %p127, %p128
    %s130 = ssub.s32 %s19, %s31
    %p131 = scmp.eq.s32.totalorder %s130, 0
    %s133 = sadd.s32 %s132, 1
    %s134 = scalar_select %p131, %s132, %s133
    %p137 = pneg %p131
    %p138 = scmp.eq.s32.totalorder %s12, 1
    %p139 = por %p137, %p138
    %p140 = scmp.ne.s32.totalorder %s132, %s135
    %p141 = scmp.eq.s32.totalorder %s12, 0
    %p142 = por %p140, %p141
    %p143 = scmp.ne.s32.totalorder %s132, %s135
    %p144 = scmp.eq.s32.totalorder %s17, 1
    %p145 = por %p143, %p144
    %p146 = scmp.ne.s32.totalorder %s135, %s136
    %p147 = scmp.eq.s32.totalorder %s17, 0
    %p148 = por %p146, %p147
    %p149 = scmp.ne.s32.totalorder %s135, %s136
    %p150 = scmp.eq.s32.totalorder %s18, 1
    %p151 = por %p149, %p150
    %p153 = scmp.ne.s32.totalorder %s136, %s152
    %p154 = scmp.eq.s32.totalorder %s18, 0
    %p155 = por %p153, %p154
    %s156 = ssub.s32 %s19, %s31
    %p157 = scmp.eq.s32.totalorder %s156, 0
    %s159 = sadd.s32 %s158, 1
    %s160 = scalar_select %p157, %s158, %s159
    %p163 = pneg %p157
    %p164 = scmp.eq.s32.totalorder %s12, 1
    %p165 = por %p163, %p164
    %p166 = scmp.ne.s32.totalorder %s158, %s161
    %p167 = scmp.eq.s32.totalorder %s12, 0
    %p168 = por %p166, %p167
    %p169 = scmp.ne.s32.totalorder %s158, %s161
    %p170 = scmp.eq.s32.totalorder %s17, 1
    %p171 = por %p169, %p170
    %p172 = scmp.ne.s32.totalorder %s161, %s162
    %p173 = scmp.eq.s32.totalorder %s17, 0
    %p174 = por %p172, %p173
    %p175 = scmp.ne.s32.totalorder %s161, %s162
    %p176 = scmp.eq.s32.totalorder %s18, 1
    %p177 = por %p175, %p176
    %p179 = scmp.ne.s32.totalorder %s162, %s178
    %p180 = scmp.eq.s32.totalorder %s18, 0
    %p181 = por %p179, %p180
    %p182 = scmp.le.s32.totalorder 1, %s12
    %p183 = scmp.lt.s32.totalorder %s12, 3
    %p184 = pnand %p182, %p183
    %p185 = pneg %p184
    // Predicated region
    $region9: #{multiscale_block.2} parent=5 // pred_check
      _
    $region10: #{multiscale_block.2} parent=5 // pred_check_branch
      %187 = sbr.rel (%p184) target = $region12
    $region11: #{multiscale_block.2} parent=5 // pred_region
      %s188 = ssub.s32 %s12, 1
      // Predicated region
      $region13: #{multiscale_block.2} parent=11 // pred_check
        %p189 = pneg %p73
      $region14: #{multiscale_block.2} parent=11 // pred_check_branch
        %191 = sbr.rel (%p189) target = $region16
      $region15: #{multiscale_block.2} parent=11 // pred_region
        _
      $region16: #{multiscale_block.2} parent=11 // pred_fallthru
        _
      // Predicated region
      $region17: #{multiscale_block.2} parent=11 // pred_check
        %p192 = pneg %p94
      $region18: #{multiscale_block.2} parent=11 // pred_check_branch
        %194 = sbr.rel (%p192) target = $region20
      $region19: #{multiscale_block.2} parent=11 // pred_region
        _
      $region20: #{multiscale_block.2} parent=11 // pred_fallthru
        _
    $region12: #{multiscale_block.2} parent=5 // pred_fallthru
      _
    %p195 = scmp.lt.s32.totalorder %s12, 2
    // Predicated region
    $region21: #{multiscale_block.2} parent=5 // pred_check
      %p196 = pneg %p195
    $region22: #{multiscale_block.2} parent=5 // pred_check_branch
      %198 = sbr.rel (%p196) target = $region24
    $region23: #{multiscale_block.2} parent=5 // pred_region
      // Predicated region
      $region25: #{multiscale_block.2} parent=23 // pred_check
        %p199 = pneg %p46
      $region26: #{multiscale_block.2} parent=23 // pred_check_branch
        %201 = sbr.rel (%p199) target = $region28
      $region27: #{multiscale_block.2} parent=23 // pred_region
        %s202 = smul.u32 4, %s20
        %p203 = scmp.lt.s32.totalorder %s19, 1
        %s204 = scalar_select %p203, %s19, 1
        %p205 = scmp.lt.s32.totalorder %s202, 3
        %s206 = scalar_select %p205, %s202, 3
        %s207 = smul.addr %s204, 252
        %s208 = sadd.s32 %s206, %s207
        %s209 = smul.addr %s208, 8
        %s210 = scalar_lea.vmem %s0, %s209
        %s211 = smul.u32 4, %s20
      $region28: #{multiscale_block.2} parent=23 // pred_fallthru
        _
    $region24: #{multiscale_block.2} parent=5 // pred_fallthru
      _
    %p212 = scmp.le.s32.totalorder 1, %s12
    %p213 = scmp.lt.s32.totalorder %s12, 3
    %p214 = pnand %p212, %p213
    %p215 = pneg %p214
    // Predicated region
    $region29: #{multiscale_block.2} parent=5 // pred_check
      _
    $region30: #{multiscale_block.2} parent=5 // pred_check_branch
      %217 = sbr.rel (%p214) target = $region32
    $region31: #{multiscale_block.2} parent=5 // pred_region
      %s218 = ssub.s32 %s12, 1
      %s219 = smul.u32 4, %s22
      %p220 = scmp.lt.s32.totalorder %s21, 1
      %s221 = scalar_select %p220, %s21, 1
      %p222 = scmp.lt.s32.totalorder %s219, 3
      %s223 = scalar_select %p222, %s219, 3
      %s224 = smul.addr %s221, 252
      %s225 = sadd.s32 %s223, %s224
      %s226 = smul.addr %s225, 8
      %s227 = scalar_lea.vmem %s0, %s226
      %p228 = pneg %p52
      %p229 = pneg %p49
      %p230 = pneg %p73
      %p231 = pneg %p70
      %p232 = pneg %p94
      %p233 = pneg %p91
      %p234 = pneg %p122
      %p235 = pneg %p119
      %s236 = smul.u32 4, %s22
      %p237 = scmp.lt.s32.totalorder %s21, 1
      %s238 = scalar_select %p237, %s21, 1
      %p239 = scmp.lt.s32.totalorder %s236, 3
      %s240 = scalar_select %p239, %s236, 3
      %s241 = smul.addr %s238, 8
      %s242 = sadd.s32 %s240, %s241
      %s243 = smul.addr %s242, 8
      %s244 = scalar_lea.vmem %s3, %s243
      %p245 = pneg %p148
      %p246 = pneg %p145
      %p247 = scmp.lt.s32.totalorder %s21, 1
      %s248 = scalar_select %p247, %s21, 1
      %s249 = smul.addr %s248, 2
      %s250 = smul.addr %s249, 8
      %s251 = scalar_lea.vmem %s4, %s250
      %p252 = pneg %p174
      %p253 = pneg %p171
      %p254 = scmp.lt.s32.totalorder %s21, 1
      %s255 = scalar_select %p254, %s21, 1
      %s256 = smul.addr %s255, 2
      %s257 = smul.addr %s256, 8
      %s258 = scalar_lea.vmem %s5, %s257
      %s259 = smul.u32 4, %s22
      %p260 = scmp.lt.s32.totalorder %s21, 1
      %s261 = scalar_select %p260, %s21, 1
      %p262 = scmp.lt.s32.totalorder %s259, 3
      %s263 = scalar_select %p262, %s259, 3
      %s264 = smul.addr %s261, 252
      %s265 = sadd.s32 %s263, %s264
      %s266 = smul.addr %s265, 8
      %s267 = scalar_lea.vmem %s0, %s266
      %s268 = smul.u32 4, %s22
      %s269 = smul.u32 4, %s22
      %p270 = scmp.lt.s32.totalorder %s21, 1
      %s271 = scalar_select %p270, %s21, 1
      %p272 = scmp.lt.s32.totalorder %s269, 3
      %s273 = scalar_select %p272, %s269, 3
      %s274 = smul.addr %s271, 8
      %s275 = sadd.s32 %s273, %s274
      %s276 = smul.addr %s275, 8
      %s277 = scalar_lea.vmem %s3, %s276
      %s278 = smul.u32 4, %s22
      %p279 = scmp.lt.s32.totalorder %s21, 1
      %s280 = scalar_select %p279, %s21, 1
      %s281 = smul.addr %s280, 2
      %s282 = smul.addr %s281, 8
      %s283 = scalar_lea.vmem %s4, %s282
      %p284 = scmp.lt.s32.totalorder %s21, 1
      %s285 = scalar_select %p284, %s21, 1
      %s286 = smul.addr %s285, 2
      %s287 = smul.addr %s286, 8
      %s288 = scalar_lea.vmem %s5, %s287
      %v289 = vld [vmem:[%s1] sm:$0xff]
      %v290 = vld [vmem:[%s1 + $0x8] sm:$0xff]
      %v291 = vld [vmem:[%s1 + $0x10] sm:$0xff]
      %v292 = vld [vmem:[%s1 + $0x18] sm:$0xff]
      %v293 = vld [vmem:[%s1 + $0x20] sm:$0xff]
      %v294 = vld [vmem:[%s1 + $0x28] sm:$0xff]
      %v295 = vld [vmem:[%s1 + $0x30] sm:$0xff]
      %v296 = vld [vmem:[%s1 + $0x38] sm:$0xff]
      %v297 = vld [vmem:[%s267] sm:$0xff]
      %v298 = vld [vmem:[%s267 + $0x8] sm:$0xff]
      %v299 = vld [vmem:[%s267 + $0x10] sm:$0xff]
      %v300 = vld [vmem:[%s267 + $0x18] sm:$0xff]
      %v301 = vld [vmem:[%s267 + $0x20] sm:$0xff]
      %v302 = vld [vmem:[%s267 + $0x28] sm:$0xff]
      %v303 = vld [vmem:[%s267 + $0x30] sm:$0xff]
      %v304 = vld [vmem:[%s267 + $0x38] sm:$0xff]
      %v305 = vld [vmem:[%s267 + $0x40] sm:$0xff]
      %v306 = vld [vmem:[%s267 + $0x48] sm:$0xff]
      %v307 = vld [vmem:[%s267 + $0x50] sm:$0xff]
      %v308 = vld [vmem:[%s267 + $0x58] sm:$0xff]
      %v309 = vld [vmem:[%s267 + $0x60] sm:$0xff]
      %v310 = vld [vmem:[%s267 + $0x68] sm:$0xff]
      %v311 = vld [vmem:[%s267 + $0x70] sm:$0xff]
      %v312 = vld [vmem:[%s267 + $0x78] sm:$0xff]
      %v313 = vld [vmem:[%s267 + $0x80] sm:$0xff]
      %v314 = vld [vmem:[%s267 + $0x88] sm:$0xff]
      %v315 = vld [vmem:[%s267 + $0x90] sm:$0xff]
      %v316 = vld [vmem:[%s267 + $0x98] sm:$0xff]
      %v317 = vld [vmem:[%s267 + $0xa0] sm:$0xff]
      %v318 = vld [vmem:[%s267 + $0xa8] sm:$0xff]
      %v319 = vld [vmem:[%s267 + $0xb0] sm:$0xff]
      %v320 = vld [vmem:[%s267 + $0xb8] sm:$0xff]
      %v321 = vld [vmem:[%s267 + $0xc0] sm:$0xff]
      %v322 = vld [vmem:[%s267 + $0xc8] sm:$0xff]
      %v323 = vld [vmem:[%s267 + $0xd0] sm:$0xff]
      %v324 = vld [vmem:[%s267 + $0xd8] sm:$0xff]
      %v325 = vld [vmem:[%s267 + $0xe0] sm:$0xff]
      %v326 = vld [vmem:[%s267 + $0xe8] sm:$0xff]
      %v327 = vld [vmem:[%s267 + $0xf0] sm:$0xff]
      %v328 = vld [vmem:[%s267 + $0xf8] sm:$0xff]
      %v329 = vld [vmem:[%s267 + $0x100] sm:$0xff]
      %v330 = vld [vmem:[%s267 + $0x108] sm:$0xff]
      %v331 = vld [vmem:[%s267 + $0x110] sm:$0xff]
      %v332 = vld [vmem:[%s267 + $0x118] sm:$0xff]
      %v333 = vld [vmem:[%s267 + $0x120] sm:$0xff]
      %v334 = vld [vmem:[%s267 + $0x128] sm:$0xff]
      %v335 = vld [vmem:[%s267 + $0x130] sm:$0xff]
      %v336 = vld [vmem:[%s267 + $0x138] sm:$0xff]
      %v337 = vld [vmem:[%s267 + $0x140] sm:$0xff]
      %v338 = vld [vmem:[%s267 + $0x148] sm:$0xff]
      %v339 = vld [vmem:[%s267 + $0x150] sm:$0xff]
      %v340 = vld [vmem:[%s267 + $0x158] sm:$0xff]
      %v341 = vld [vmem:[%s267 + $0x160] sm:$0xff]
      %v342 = vld [vmem:[%s267 + $0x168] sm:$0xff]
      %v343 = vld [vmem:[%s267 + $0x170] sm:$0xff]
      %v344 = vld [vmem:[%s267 + $0x178] sm:$0xff]
      %v345 = vld [vmem:[%s267 + $0x180] sm:$0xff]
      %v346 = vld [vmem:[%s267 + $0x188] sm:$0xff]
      %v347 = vld [vmem:[%s267 + $0x190] sm:$0xff]
      %v348 = vld [vmem:[%s267 + $0x198] sm:$0xff]
      %v349 = vld [vmem:[%s267 + $0x1a0] sm:$0xff]
      %v350 = vld [vmem:[%s267 + $0x1a8] sm:$0xff]
      %v351 = vld [vmem:[%s267 + $0x1b0] sm:$0xff]
      %v352 = vld [vmem:[%s267 + $0x1b8] sm:$0xff]
      %v353 = vld [vmem:[%s267 + $0x1c0] sm:$0xff]
      %v354 = vld [vmem:[%s267 + $0x1c8] sm:$0xff]
      %v355 = vld [vmem:[%s267 + $0x1d0] sm:$0xff]
      %v356 = vld [vmem:[%s267 + $0x1d8] sm:$0xff]
      %v357 = vld [vmem:[%s267 + $0x1e0] sm:$0xff]
      %v358 = vld [vmem:[%s267 + $0x1e8] sm:$0xff]
      %v359 = vld [vmem:[%s267 + $0x1f0] sm:$0xff]
      %v360 = vld [vmem:[%s267 + $0x1f8] sm:$0xff]
      %v361 = vld [vmem:[%s267 + $0x200] sm:$0xff]
      %v362 = vld [vmem:[%s267 + $0x208] sm:$0xff]
      %v363 = vld [vmem:[%s267 + $0x210] sm:$0xff]
      %v364 = vld [vmem:[%s267 + $0x218] sm:$0xff]
      %v365 = vld [vmem:[%s267 + $0x220] sm:$0xff]
      %v366 = vld [vmem:[%s267 + $0x228] sm:$0xff]
      %v367 = vld [vmem:[%s267 + $0x230] sm:$0xff]
      %v368 = vld [vmem:[%s267 + $0x238] sm:$0xff]
      %v369 = vld [vmem:[%s267 + $0x240] sm:$0xff]
      %v370 = vld [vmem:[%s267 + $0x248] sm:$0xff]
      %v371 = vld [vmem:[%s267 + $0x250] sm:$0xff]
      %v372 = vld [vmem:[%s267 + $0x258] sm:$0xff]
      %v373 = vld [vmem:[%s267 + $0x260] sm:$0xff]
      %v374 = vld [vmem:[%s267 + $0x268] sm:$0xff]
      %v375 = vld [vmem:[%s267 + $0x270] sm:$0xff]
      %v376 = vld [vmem:[%s267 + $0x278] sm:$0xff]
      %v377 = vld [vmem:[%s267 + $0x280] sm:$0xff]
      %v378 = vld [vmem:[%s267 + $0x288] sm:$0xff]
      %v379 = vld [vmem:[%s267 + $0x290] sm:$0xff]
      %v380 = vld [vmem:[%s267 + $0x298] sm:$0xff]
      %v381 = vld [vmem:[%s267 + $0x2a0] sm:$0xff]
      %v382 = vld [vmem:[%s267 + $0x2a8] sm:$0xff]
      %v383 = vld [vmem:[%s267 + $0x2b0] sm:$0xff]
      %v384 = vld [vmem:[%s267 + $0x2b8] sm:$0xff]
      %v385 = vld [vmem:[%s267 + $0x2c0] sm:$0xff]
      %v386 = vld [vmem:[%s267 + $0x2c8] sm:$0xff]
      %v387 = vld [vmem:[%s267 + $0x2d0] sm:$0xff]
      %v388 = vld [vmem:[%s267 + $0x2d8] sm:$0xff]
      %v389 = vld [vmem:[%s267 + $0x2e0] sm:$0xff]
      %v390 = vld [vmem:[%s267 + $0x2e8] sm:$0xff]
      %v391 = vld [vmem:[%s267 + $0x2f0] sm:$0xff]
      %v392 = vld [vmem:[%s267 + $0x2f8] sm:$0xff]
      %v393 = vld [vmem:[%s267 + $0x300] sm:$0xff]
      %v394 = vld [vmem:[%s267 + $0x308] sm:$0xff]
      %v395 = vld [vmem:[%s267 + $0x310] sm:$0xff]
      %v396 = vld [vmem:[%s267 + $0x318] sm:$0xff]
      %v397 = vld [vmem:[%s267 + $0x320] sm:$0xff]
      %v398 = vld [vmem:[%s267 + $0x328] sm:$0xff]
      %v399 = vld [vmem:[%s267 + $0x330] sm:$0xff]
      %v400 = vld [vmem:[%s267 + $0x338] sm:$0xff]
      %v401 = vld [vmem:[%s267 + $0x340] sm:$0xff]
      %v402 = vld [vmem:[%s267 + $0x348] sm:$0xff]
      %v403 = vld [vmem:[%s267 + $0x350] sm:$0xff]
      %v404 = vld [vmem:[%s267 + $0x358] sm:$0xff]
      %v405 = vld [vmem:[%s267 + $0x360] sm:$0xff]
      %v406 = vld [vmem:[%s267 + $0x368] sm:$0xff]
      %v407 = vld [vmem:[%s267 + $0x370] sm:$0xff]
      %v408 = vld [vmem:[%s267 + $0x378] sm:$0xff]
      %v409 = vld [vmem:[%s267 + $0x380] sm:$0xff]
      %v410 = vld [vmem:[%s267 + $0x388] sm:$0xff]
      %v411 = vld [vmem:[%s267 + $0x390] sm:$0xff]
      %v412 = vld [vmem:[%s267 + $0x398] sm:$0xff]
      %v413 = vld [vmem:[%s267 + $0x3a0] sm:$0xff]
      %v414 = vld [vmem:[%s267 + $0x3a8] sm:$0xff]
      %v415 = vld [vmem:[%s267 + $0x3b0] sm:$0xff]
      %v416 = vld [vmem:[%s267 + $0x3b8] sm:$0xff]
      %v417 = vld [vmem:[%s267 + $0x3c0] sm:$0xff]
      %v418 = vld [vmem:[%s267 + $0x3c8] sm:$0xff]
      %v419 = vld [vmem:[%s267 + $0x3d0] sm:$0xff]
      %v420 = vld [vmem:[%s267 + $0x3d8] sm:$0xff]
      %v421 = vld [vmem:[%s267 + $0x3e0] sm:$0xff]
      %v422 = vld [vmem:[%s267 + $0x3e8] sm:$0xff]
      %v423 = vld [vmem:[%s267 + $0x3f0] sm:$0xff]
      %v424 = vld [vmem:[%s267 + $0x3f8] sm:$0xff]
      %v425 = vld [vmem:[%s267 + $0x400] sm:$0xff]
      %v426 = vld [vmem:[%s267 + $0x408] sm:$0xff]
      %v427 = vld [vmem:[%s267 + $0x410] sm:$0xff]
      %v428 = vld [vmem:[%s267 + $0x418] sm:$0xff]
      %v429 = vld [vmem:[%s267 + $0x420] sm:$0xff]
      %v430 = vld [vmem:[%s267 + $0x428] sm:$0xff]
      %v431 = vld [vmem:[%s267 + $0x430] sm:$0xff]
      %v432 = vld [vmem:[%s267 + $0x438] sm:$0xff]
      %v433 = vld [vmem:[%s267 + $0x440] sm:$0xff]
      %v434 = vld [vmem:[%s267 + $0x448] sm:$0xff]
      %v435 = vld [vmem:[%s267 + $0x450] sm:$0xff]
      %v436 = vld [vmem:[%s267 + $0x458] sm:$0xff]
      %v437 = vld [vmem:[%s267 + $0x460] sm:$0xff]
      %v438 = vld [vmem:[%s267 + $0x468] sm:$0xff]
      %v439 = vld [vmem:[%s267 + $0x470] sm:$0xff]
      %v440 = vld [vmem:[%s267 + $0x478] sm:$0xff]
      %v441 = vld [vmem:[%s267 + $0x480] sm:$0xff]
      %v442 = vld [vmem:[%s267 + $0x488] sm:$0xff]
      %v443 = vld [vmem:[%s267 + $0x490] sm:$0xff]
      %v444 = vld [vmem:[%s267 + $0x498] sm:$0xff]
      %v445 = vld [vmem:[%s267 + $0x4a0] sm:$0xff]
      %v446 = vld [vmem:[%s267 + $0x4a8] sm:$0xff]
      %v447 = vld [vmem:[%s267 + $0x4b0] sm:$0xff]
      %v448 = vld [vmem:[%s267 + $0x4b8] sm:$0xff]
      %v449 = vld [vmem:[%s267 + $0x4c0] sm:$0xff]
      %v450 = vld [vmem:[%s267 + $0x4c8] sm:$0xff]
      %v451 = vld [vmem:[%s267 + $0x4d0] sm:$0xff]
      %v452 = vld [vmem:[%s267 + $0x4d8] sm:$0xff]
      %v453 = vld [vmem:[%s267 + $0x4e0] sm:$0xff]
      %v454 = vld [vmem:[%s267 + $0x4e8] sm:$0xff]
      %v455 = vld [vmem:[%s267 + $0x4f0] sm:$0xff]
      %v456 = vld [vmem:[%s267 + $0x4f8] sm:$0xff]
      %v457 = vld [vmem:[%s267 + $0x500] sm:$0xff]
      %v458 = vld [vmem:[%s267 + $0x508] sm:$0xff]
      %v459 = vld [vmem:[%s267 + $0x510] sm:$0xff]
      %v460 = vld [vmem:[%s267 + $0x518] sm:$0xff]
      %v461 = vld [vmem:[%s267 + $0x520] sm:$0xff]
      %v462 = vld [vmem:[%s267 + $0x528] sm:$0xff]
      %v463 = vld [vmem:[%s267 + $0x530] sm:$0xff]
      %v464 = vld [vmem:[%s267 + $0x538] sm:$0xff]
      %v465 = vld [vmem:[%s267 + $0x540] sm:$0xff]
      %v466 = vld [vmem:[%s267 + $0x548] sm:$0xff]
      %v467 = vld [vmem:[%s267 + $0x550] sm:$0xff]
      %v468 = vld [vmem:[%s267 + $0x558] sm:$0xff]
      %v469 = vld [vmem:[%s267 + $0x560] sm:$0xff]
      %v470 = vld [vmem:[%s267 + $0x568] sm:$0xff]
      %v471 = vld [vmem:[%s267 + $0x570] sm:$0xff]
      %v472 = vld [vmem:[%s267 + $0x578] sm:$0xff]
      %v473 = vld [vmem:[%s267 + $0x580] sm:$0xff]
      %v474 = vld [vmem:[%s267 + $0x588] sm:$0xff]
      %v475 = vld [vmem:[%s267 + $0x590] sm:$0xff]
      %v476 = vld [vmem:[%s267 + $0x598] sm:$0xff]
      %v477 = vld [vmem:[%s267 + $0x5a0] sm:$0xff]
      %v478 = vld [vmem:[%s267 + $0x5a8] sm:$0xff]
      %v479 = vld [vmem:[%s267 + $0x5b0] sm:$0xff]
      %v480 = vld [vmem:[%s267 + $0x5b8] sm:$0xff]
      %v481 = vld [vmem:[%s267 + $0x5c0] sm:$0xff]
      %v482 = vld [vmem:[%s267 + $0x5c8] sm:$0xff]
      %v483 = vld [vmem:[%s267 + $0x5d0] sm:$0xff]
      %v484 = vld [vmem:[%s267 + $0x5d8] sm:$0xff]
      %v485 = vld [vmem:[%s267 + $0x5e0] sm:$0xff]
      %v486 = vld [vmem:[%s267 + $0x5e8] sm:$0xff]
      %v487 = vld [vmem:[%s267 + $0x5f0] sm:$0xff]
      %v488 = vld [vmem:[%s267 + $0x5f8] sm:$0xff]
      %v489 = vld [vmem:[%s267 + $0x600] sm:$0xff]
      %v490 = vld [vmem:[%s267 + $0x608] sm:$0xff]
      %v491 = vld [vmem:[%s267 + $0x610] sm:$0xff]
      %v492 = vld [vmem:[%s267 + $0x618] sm:$0xff]
      %v493 = vld [vmem:[%s267 + $0x620] sm:$0xff]
      %v494 = vld [vmem:[%s267 + $0x628] sm:$0xff]
      %v495 = vld [vmem:[%s267 + $0x630] sm:$0xff]
      %v496 = vld [vmem:[%s267 + $0x638] sm:$0xff]
      %v497 = vld [vmem:[%s267 + $0x640] sm:$0xff]
      %v498 = vld [vmem:[%s267 + $0x648] sm:$0xff]
      %v499 = vld [vmem:[%s267 + $0x650] sm:$0xff]
      %v500 = vld [vmem:[%s267 + $0x658] sm:$0xff]
      %v501 = vld [vmem:[%s267 + $0x660] sm:$0xff]
      %v502 = vld [vmem:[%s267 + $0x668] sm:$0xff]
      %v503 = vld [vmem:[%s267 + $0x670] sm:$0xff]
      %v504 = vld [vmem:[%s267 + $0x678] sm:$0xff]
      %v505 = vld [vmem:[%s267 + $0x680] sm:$0xff]
      %v506 = vld [vmem:[%s267 + $0x688] sm:$0xff]
      %v507 = vld [vmem:[%s267 + $0x690] sm:$0xff]
      %v508 = vld [vmem:[%s267 + $0x698] sm:$0xff]
      %v509 = vld [vmem:[%s267 + $0x6a0] sm:$0xff]
      %v510 = vld [vmem:[%s267 + $0x6a8] sm:$0xff]
      %v511 = vld [vmem:[%s267 + $0x6b0] sm:$0xff]
      %v512 = vld [vmem:[%s267 + $0x6b8] sm:$0xff]
      %v513 = vld [vmem:[%s267 + $0x6c0] sm:$0xff]
      %v514 = vld [vmem:[%s267 + $0x6c8] sm:$0xff]
      %v515 = vld [vmem:[%s267 + $0x6d0] sm:$0xff]
      %v516 = vld [vmem:[%s267 + $0x6d8] sm:$0xff]
      %v517 = vld [vmem:[%s267 + $0x6e0] sm:$0xff]
      %v518 = vld [vmem:[%s267 + $0x6e8] sm:$0xff]
      %v519 = vld [vmem:[%s267 + $0x6f0] sm:$0xff]
      %v520 = vld [vmem:[%s267 + $0x6f8] sm:$0xff]
      %v521 = vld [vmem:[%s267 + $0x700] sm:$0xff]
      %v522 = vld [vmem:[%s267 + $0x708] sm:$0xff]
      %v523 = vld [vmem:[%s267 + $0x710] sm:$0xff]
      %v524 = vld [vmem:[%s267 + $0x718] sm:$0xff]
      %v525 = vld [vmem:[%s267 + $0x720] sm:$0xff]
      %v526 = vld [vmem:[%s267 + $0x728] sm:$0xff]
      %v527 = vld [vmem:[%s267 + $0x730] sm:$0xff]
      %v528 = vld [vmem:[%s267 + $0x738] sm:$0xff]
      %v529 = vld [vmem:[%s267 + $0x740] sm:$0xff]
      %v530 = vld [vmem:[%s267 + $0x748] sm:$0xff]
      %v531 = vld [vmem:[%s267 + $0x750] sm:$0xff]
      %v532 = vld [vmem:[%s267 + $0x758] sm:$0xff]
      %v533 = vld [vmem:[%s267 + $0x760] sm:$0xff]
      %v534 = vld [vmem:[%s267 + $0x768] sm:$0xff]
      %v535 = vld [vmem:[%s267 + $0x770] sm:$0xff]
      %v536 = vld [vmem:[%s267 + $0x778] sm:$0xff]
      %v537 = vld [vmem:[%s267 + $0x780] sm:$0xff]
      %v538 = vld [vmem:[%s267 + $0x788] sm:$0xff]
      %v539 = vld [vmem:[%s267 + $0x790] sm:$0xff]
      %v540 = vld [vmem:[%s267 + $0x798] sm:$0xff]
      %v541 = vld [vmem:[%s267 + $0x7a0] sm:$0xff]
      %v542 = vld [vmem:[%s267 + $0x7a8] sm:$0xff]
      %v543 = vld [vmem:[%s267 + $0x7b0] sm:$0xff]
      %v544 = vld [vmem:[%s267 + $0x7b8] sm:$0xff]
      %v545 = vld [vmem:[%s267 + $0x7c0] sm:$0xf]
      %v546 = vld [vmem:[%s267 + $0x7c8] sm:$0xf]
      %v547 = vld [vmem:[%s267 + $0x7d0] sm:$0xf]
      %v548 = vld [vmem:[%s267 + $0x7d8] sm:$0xf]
      %v549 = vld [vmem:[%s2] sm:$0xff]
      %v550 = vld [vmem:[%s2 + $0x8] sm:$0xff]
      %552 = vset.pattern.permute.xlu0 0
      %553 = vperm.xlu0 %552, %v549
      %v554 = vpop.permute.xlu0 %553
      %557 = vset.pattern.permute.xlu0 0
      %558 = vperm.xlu0 %557, %v550
      %v559 = vpop.permute.xlu0 %558
      %vm561 = vcmask 949248
      %v563 = vsel %vm561, %v292, 0
      %v566 = vsel %vm561, %v296, 0
      %vm568 = vcmask 1043456
      %v570 = vsel %vm568, %v545, 0
      %v573 = vsel %vm568, %v546, 0
      %v576 = vsel %vm568, %v547, 0
      %v579 = vsel %vm568, %v548, 0
      %581 = vmatprep.subr.mxu0 %v298
      %582 = vmatpush1.msra.mxu0 %v297
      %583 = vmatprep.subr.mxu0 %v302
      %584 = vmatpush1.msra.mxu0 %v301
      %585 = vmatprep.subr.mxu0 %v306
      %586 = vmatpush1.msra.mxu0 %v305
      %587 = vmatprep.subr.mxu0 %v310
      %588 = vmatpush1.msra.mxu0 %v309
      %589 = vmatprep.subr.mxu0 %v314
      %590 = vmatpush1.msra.mxu0 %v313
      %591 = vmatprep.subr.mxu0 %v318
      %592 = vmatpush1.msra.mxu0 %v317
      %593 = vmatprep.subr.mxu0 %v322
      %594 = vmatpush1.msra.mxu0 %v321
      %595 = vmatprep.subr.mxu0 %v326
      %596 = vmatpush1.msra.mxu0 %v325
      %597 = vmatprep.subr.mxu0 %v330
      %598 = vmatpush1.msra.mxu0 %v329
      %599 = vmatprep.subr.mxu0 %v334
      %600 = vmatpush1.msra.mxu0 %v333
      %601 = vmatprep.subr.mxu0 %v338
      %602 = vmatpush1.msra.mxu0 %v337
      %603 = vmatprep.subr.mxu0 %v342
      %604 = vmatpush1.msra.mxu0 %v341
      %605 = vmatprep.subr.mxu0 %v346
      %606 = vmatpush1.msra.mxu0 %v345
      %607 = vmatprep.subr.mxu0 %v350
      %608 = vmatpush1.msra.mxu0 %v349
      %609 = vmatprep.subr.mxu0 %v354
      %610 = vmatpush1.msra.mxu0 %v353
      %611 = vmatprep.subr.mxu0 %v358
      %612 = vmatpush1.msra.mxu0 %v357
      %613 = vmatprep.subr.mxu0 %v362
      %614 = vmatpush1.msra.mxu0 %v361
      %615 = vmatprep.subr.mxu0 %v366
      %616 = vmatpush1.msra.mxu0 %v365
      %617 = vmatprep.subr.mxu0 %v370
      %618 = vmatpush1.msra.mxu0 %v369
      %619 = vmatprep.subr.mxu0 %v374
      %620 = vmatpush1.msra.mxu0 %v373
      %621 = vmatprep.subr.mxu0 %v378
      %622 = vmatpush1.msra.mxu0 %v377
      %623 = vmatprep.subr.mxu0 %v382
      %624 = vmatpush1.msra.mxu0 %v381
      %625 = vmatprep.subr.mxu0 %v386
      %626 = vmatpush1.msra.mxu0 %v385
      %627 = vmatprep.subr.mxu0 %v390
      %628 = vmatpush1.msra.mxu0 %v389
      %629 = vmatprep.subr.mxu0 %v394
      %630 = vmatpush1.msra.mxu0 %v393
      %631 = vmatprep.subr.mxu0 %v398
      %632 = vmatpush1.msra.mxu0 %v397
      %633 = vmatprep.subr.mxu0 %v402
      %634 = vmatpush1.msra.mxu0 %v401
      %635 = vmatprep.subr.mxu0 %v406
      %636 = vmatpush1.msra.mxu0 %v405
      %637 = vmatprep.subr.mxu0 %v410
      %638 = vmatpush1.msra.mxu0 %v409
      %639 = vmatprep.subr.mxu0 %v414
      %640 = vmatpush1.msra.mxu0 %v413
      %641 = vmatprep.subr.mxu0 %v418
      %642 = vmatpush1.msra.mxu0 %v417
      %643 = vmatprep.subr.mxu0 %v422
      %644 = vmatpush1.msra.mxu0 %v421
      %645 = vmatprep.mubr.f32.mxu0 %v290
      %646 = vmatmul.mubr.f32.gmra.mrb[0].mxu0 %v289
      %v647 = vpop.f32.mrb[0].mxu0
      %v648 = vadd.f32 %v554, %v647
      %v649 = vpop.f32.mrb[0].mxu0
      %v650 = vadd.f32 %v554, %v649
      %651 = vmatprep.mubr.f32.mxu0 %v294
      %652 = vmatmul.mubr.f32.gmra.mrb[0].mxu0 %v293
      %v653 = vpop.f32.mrb[0].mxu0
      %v654 = vadd.f32 %v559, %v653
      %v655 = vpop.f32.mrb[0].mxu0
      %v656 = vadd.f32 %v559, %v655
      %657 = vdwg.mxu0
      %658 = vmatprep.subr.mxu0 %v426
      %659 = vmatpush1.msra.mxu0 %v425
      %660 = vmatprep.subr.mxu0 %v430
      %661 = vmatpush1.msra.mxu0 %v429
      %662 = vmatprep.subr.mxu0 %v434
      %663 = vmatpush1.msra.mxu0 %v433
      %664 = vmatprep.subr.mxu0 %v438
      %665 = vmatpush1.msra.mxu0 %v437
      %666 = vmatprep.subr.mxu0 %v442
      %667 = vmatpush1.msra.mxu0 %v441
      %668 = vmatprep.subr.mxu0 %v446
      %669 = vmatpush1.msra.mxu0 %v445
      %670 = vmatprep.subr.mxu0 %v450
      %671 = vmatpush1.msra.mxu0 %v449
      %672 = vmatprep.subr.mxu0 %v454
      %673 = vmatpush1.msra.mxu0 %v453
      %674 = vmatprep.subr.mxu0 %v458
      %675 = vmatpush1.msra.mxu0 %v457
      %676 = vmatprep.subr.mxu0 %v462
      %677 = vmatpush1.msra.mxu0 %v461
      %678 = vmatprep.subr.mxu0 %v466
      %679 = vmatpush1.msra.mxu0 %v465
      %680 = vmatprep.subr.mxu0 %v470
      %681 = vmatpush1.msra.mxu0 %v469
      %682 = vmatprep.subr.mxu0 %v474
      %683 = vmatpush1.msra.mxu0 %v473
      %684 = vmatprep.subr.mxu0 %v478
      %685 = vmatpush1.msra.mxu0 %v477
      %686 = vmatprep.subr.mxu0 %v482
      %687 = vmatpush1.msra.mxu0 %v481
      %688 = vmatprep.subr.mxu0 %v486
      %689 = vmatpush1.msra.mxu0 %v485
      %690 = vmatprep.subr.mxu0 %v490
      %691 = vmatpush1.msra.mxu0 %v489
      %692 = vmatprep.subr.mxu0 %v494
      %693 = vmatpush1.msra.mxu0 %v493
      %694 = vmatprep.subr.mxu0 %v498
      %695 = vmatpush1.msra.mxu0 %v497
      %696 = vmatprep.subr.mxu0 %v502
      %697 = vmatpush1.msra.mxu0 %v501
      %698 = vmatprep.subr.mxu0 %v506
      %699 = vmatpush1.msra.mxu0 %v505
      %700 = vmatprep.subr.mxu0 %v510
      %701 = vmatpush1.msra.mxu0 %v509
      %702 = vmatprep.subr.mxu0 %v514
      %703 = vmatpush1.msra.mxu0 %v513
      %704 = vmatprep.subr.mxu0 %v518
      %705 = vmatpush1.msra.mxu0 %v517
      %706 = vmatprep.subr.mxu0 %v522
      %707 = vmatpush1.msra.mxu0 %v521
      %708 = vmatprep.subr.mxu0 %v526
      %709 = vmatpush1.msra.mxu0 %v525
      %710 = vmatprep.subr.mxu0 %v530
      %711 = vmatpush1.msra.mxu0 %v529
      %712 = vmatprep.subr.mxu0 %v534
      %713 = vmatpush1.msra.mxu0 %v533
      %714 = vmatprep.subr.mxu0 %v538
      %715 = vmatpush1.msra.mxu0 %v537
      %716 = vmatprep.subr.mxu0 %v542
      %717 = vmatpush1.msra.mxu0 %v541
      %718 = vmatprep.subr.mxu0 %v573
      %719 = vmatpush1.msra.mxu0 %v570
      %720 = vmatprep.subr.mxu0 0.0
      %721 = vmatpush1.msra.mxu0 0.0
      %722 = vmatprep.mubr.f32.mxu0 %v563
      %723 = vmatmul.mubr.f32.gmra.mrb[0].mxu0 %v291
      %v724 = vpop.f32.mrb[0].mxu0
      %v725 = vadd.f32 %v648, %v724
      %v726 = vpop.f32.mrb[0].mxu0
      %v727 = vadd.f32 %v650, %v726
      %728 = vmatprep.mubr.f32.mxu0 %v566
      %729 = vmatmul.mubr.f32.gmra.mrb[0].mxu0 %v295
      %v730 = vpop.f32.mrb[0].mxu0
      %v731 = vadd.f32 %v654, %v730
      %v732 = vpop.f32.mrb[0].mxu0
      %v733 = vadd.f32 %v656, %v732
      %734 = vdwg.mxu0
      %735 = vmatprep.subr.mxu0 %v300
      %736 = vmatpush1.msra.mxu0 %v299
      %737 = vmatprep.subr.mxu0 %v304
      %738 = vmatpush1.msra.mxu0 %v303
      %739 = vmatprep.subr.mxu0 %v308
      %740 = vmatpush1.msra.mxu0 %v307
      %741 = vmatprep.subr.mxu0 %v312
      %742 = vmatpush1.msra.mxu0 %v311
      %743 = vmatprep.subr.mxu0 %v316
      %744 = vmatpush1.msra.mxu0 %v315
      %745 = vmatprep.subr.mxu0 %v320
      %746 = vmatpush1.msra.mxu0 %v319
      %747 = vmatprep.subr.mxu0 %v324
      %748 = vmatpush1.msra.mxu0 %v323
      %749 = vmatprep.subr.mxu0 %v328
      %750 = vmatpush1.msra.mxu0 %v327
      %751 = vmatprep.subr.mxu0 %v332
      %752 = vmatpush1.msra.mxu0 %v331
      %753 = vmatprep.subr.mxu0 %v336
      %754 = vmatpush1.msra.mxu0 %v335
      %755 = vmatprep.subr.mxu0 %v340
      %756 = vmatpush1.msra.mxu0 %v339
      %757 = vmatprep.subr.mxu0 %v344
      %758 = vmatpush1.msra.mxu0 %v343
      %759 = vmatprep.subr.mxu0 %v348
      %760 = vmatpush1.msra.mxu0 %v347
      %761 = vmatprep.subr.mxu0 %v352
      %762 = vmatpush1.msra.mxu0 %v351
      %763 = vmatprep.subr.mxu0 %v356
      %764 = vmatpush1.msra.mxu0 %v355
      %765 = vmatprep.subr.mxu0 %v360
      %766 = vmatpush1.msra.mxu0 %v359
      %767 = vmatprep.subr.mxu0 %v364
      %768 = vmatpush1.msra.mxu0 %v363
      %769 = vmatprep.subr.mxu0 %v368
      %770 = vmatpush1.msra.mxu0 %v367
      %771 = vmatprep.subr.mxu0 %v372
      %772 = vmatpush1.msra.mxu0 %v371
      %773 = vmatprep.subr.mxu0 %v376
      %774 = vmatpush1.msra.mxu0 %v375
      %775 = vmatprep.subr.mxu0 %v380
      %776 = vmatpush1.msra.mxu0 %v379
      %777 = vmatprep.subr.mxu0 %v384
      %778 = vmatpush1.msra.mxu0 %v383
      %779 = vmatprep.subr.mxu0 %v388
      %780 = vmatpush1.msra.mxu0 %v387
      %781 = vmatprep.subr.mxu0 %v392
      %782 = vmatpush1.msra.mxu0 %v391
      %783 = vmatprep.subr.mxu0 %v396
      %784 = vmatpush1.msra.mxu0 %v395
      %785 = vmatprep.subr.mxu0 %v400
      %786 = vmatpush1.msra.mxu0 %v399
      %787 = vmatprep.subr.mxu0 %v404
      %788 = vmatpush1.msra.mxu0 %v403
      %789 = vmatprep.subr.mxu0 %v408
      %790 = vmatpush1.msra.mxu0 %v407
      %791 = vmatprep.subr.mxu0 %v412
      %792 = vmatpush1.msra.mxu0 %v411
      %793 = vmatprep.subr.mxu0 %v416
      %794 = vmatpush1.msra.mxu0 %v415
      %795 = vmatprep.subr.mxu0 %v420
      %796 = vmatpush1.msra.mxu0 %v419
      %797 = vmatprep.subr.mxu0 %v424
      %798 = vmatpush1.msra.mxu0 %v423
      %799 = vmatprep.mubr.f32.mxu0 %v290
      %800 = vmatmul.mubr.f32.gmra.mrb[0].mxu0 %v289
      %v801 = vpop.f32.mrb[0].mxu0
      %v802 = vadd.f32 %v554, %v801
      %v803 = vpop.f32.mrb[0].mxu0
      %v804 = vadd.f32 %v554, %v803
      %805 = vmatprep.mubr.f32.mxu0 %v294
      %806 = vmatmul.mubr.f32.gmra.mrb[0].mxu0 %v293
      %v807 = vpop.f32.mrb[0].mxu0
      %v808 = vadd.f32 %v559, %v807
      %v809 = vpop.f32.mrb[0].mxu0
      %v810 = vadd.f32 %v559, %v809
      %811 = vdwg.mxu0
      %812 = vmatprep.subr.mxu0 %v428
      %813 = vmatpush1.msra.mxu0 %v427
      %814 = vmatprep.subr.mxu0 %v432
      %815 = vmatpush1.msra.mxu0 %v431
      %816 = vmatprep.subr.mxu0 %v436
      %817 = vmatpush1.msra.mxu0 %v435
      %818 = vmatprep.subr.mxu0 %v440
      %819 = vmatpush1.msra.mxu0 %v439
      %820 = vmatprep.subr.mxu0 %v444
      %821 = vmatpush1.msra.mxu0 %v443
      %822 = vmatprep.subr.mxu0 %v448
      %823 = vmatpush1.msra.mxu0 %v447
      %824 = vmatprep.subr.mxu0 %v452
      %825 = vmatpush1.msra.mxu0 %v451
      %826 = vmatprep.subr.mxu0 %v456
      %827 = vmatpush1.msra.mxu0 %v455
      %828 = vmatprep.subr.mxu0 %v460
      %829 = vmatpush1.msra.mxu0 %v459
      %830 = vmatprep.subr.mxu0 %v464
      %831 = vmatpush1.msra.mxu0 %v463
      %832 = vmatprep.subr.mxu0 %v468
      %833 = vmatpush1.msra.mxu0 %v467
      %834 = vmatprep.subr.mxu0 %v472
      %835 = vmatpush1.msra.mxu0 %v471
      %836 = vmatprep.subr.mxu0 %v476
      %837 = vmatpush1.msra.mxu0 %v475
      %838 = vmatprep.subr.mxu0 %v480
      %839 = vmatpush1.msra.mxu0 %v479
      %840 = vmatprep.subr.mxu0 %v484
      %841 = vmatpush1.msra.mxu0 %v483
      %842 = vmatprep.subr.mxu0 %v488
      %843 = vmatpush1.msra.mxu0 %v487
      %844 = vmatprep.subr.mxu0 %v492
      %845 = vmatpush1.msra.mxu0 %v491
      %846 = vmatprep.subr.mxu0 %v496
      %847 = vmatpush1.msra.mxu0 %v495
      %848 = vmatprep.subr.mxu0 %v500
      %849 = vmatpush1.msra.mxu0 %v499
      %850 = vmatprep.subr.mxu0 %v504
      %851 = vmatpush1.msra.mxu0 %v503
      %852 = vmatprep.subr.mxu0 %v508
      %853 = vmatpush1.msra.mxu0 %v507
      %854 = vmatprep.subr.mxu0 %v512
      %855 = vmatpush1.msra.mxu0 %v511
      %856 = vmatprep.subr.mxu0 %v516
      %857 = vmatpush1.msra.mxu0 %v515
      %858 = vmatprep.subr.mxu0 %v520
      %859 = vmatpush1.msra.mxu0 %v519
      %860 = vmatprep.subr.mxu0 %v524
      %861 = vmatpush1.msra.mxu0 %v523
      %862 = vmatprep.subr.mxu0 %v528
      %863 = vmatpush1.msra.mxu0 %v527
      %864 = vmatprep.subr.mxu0 %v532
      %865 = vmatpush1.msra.mxu0 %v531
      %866 = vmatprep.subr.mxu0 %v536
      %867 = vmatpush1.msra.mxu0 %v535
      %868 = vmatprep.subr.mxu0 %v540
      %869 = vmatpush1.msra.mxu0 %v539
      %870 = vmatprep.subr.mxu0 %v544
      %871 = vmatpush1.msra.mxu0 %v543
      %872 = vmatprep.subr.mxu0 %v579
      %873 = vmatpush1.msra.mxu0 %v576
      %874 = vmatprep.subr.mxu0 0.0
      %875 = vmatpush1.msra.mxu0 0.0
      %876 = vmatprep.mubr.f32.mxu0 %v563
      %877 = vmatmul.mubr.f32.gmra.mrb[0].mxu0 %v291
      %v878 = vpop.f32.mrb[0].mxu0
      %v879 = vadd.f32 %v802, %v878
      %v880 = vpop.f32.mrb[0].mxu0
      %v881 = vadd.f32 %v804, %v880
      %882 = vmatprep.mubr.f32.mxu0 %v566
      %883 = vmatmul.mubr.f32.gmra.mrb[0].mxu0 %v295
      %v884 = vpop.f32.mrb[0].mxu0
      %v885 = vadd.f32 %v808, %v884
      %v886 = vpop.f32.mrb[0].mxu0
      %v887 = vadd.f32 %v810, %v886
      %888 = vdwg.mxu0
      %889 = vst [vmem:[%s277] sm:$0xff] %v725
      %890 = vst [vmem:[%s277 + $0x8] sm:$0xff] %v727
      %891 = vst [vmem:[%s277 + $0x10] sm:$0xff] %v879
      %892 = vst [vmem:[%s277 + $0x18] sm:$0xff] %v881
      %893 = vst [vmem:[%s277 + $0x20] sm:$0xff] %v731
      %894 = vst [vmem:[%s277 + $0x28] sm:$0xff] %v733
      %895 = vst [vmem:[%s277 + $0x30] sm:$0xff] %v885
      %896 = vst [vmem:[%s277 + $0x38] sm:$0xff] %v887
      %p897 = scmp.eq.s32.totalorder %s22, 0
      // Predicated region
      $region33: #{multiscale_block.2} parent=31 // pred_check
        %p898 = pneg %p897
      $region34: #{multiscale_block.2} parent=31 // pred_check_branch
        %900 = sbr.rel (%p898) target = $region36
      $region35: #{multiscale_block.2} parent=31 // pred_region
        %vm901 = vcmask 7168
        %902 = vst.msk [vmem:[%s283] sm:$0xff] %vm901, 0.0
        %903 = vst.msk [vmem:[%s283 + $0x8] sm:$0xff] %vm901, 0.0
        %904 = vst.msk [vmem:[%s288] sm:$0xff] %vm901, 0.0
        %905 = vst.msk [vmem:[%s288 + $0x8] sm:$0xff] %vm901, 0.0
      $region36: #{multiscale_block.2} parent=31 // pred_fallthru
        _
      %v906 = vld [vmem:[%s283] sm:$0xff]
      %v907 = vld [vmem:[%s283 + $0x8] sm:$0xff]
      %v908 = vadd.f32 %v725, %v727
      %v909 = vadd.f32 %v908, %v879
      %v910 = vadd.f32 %v909, %v881
      %911 = vadd.xlane.f32.xlu0 %v910
      %v912 = vpop.xlane.xlu0 %911
      %v913 = vadd.f32 %v731, %v733
      %v914 = vadd.f32 %v913, %v885
      %v915 = vadd.f32 %v914, %v887
      %916 = vadd.xlane.f32.xlu0 %v915
      %v917 = vpop.xlane.xlu0 %916
      %v918 = vadd.f32 %v906, %v912
      %v919 = vadd.f32 %v907, %v917
      %vm920 = vcmask 7168
      %921 = vst.msk [vmem:[%s283] sm:$0xff] %vm920, %v918
      %922 = vst.msk [vmem:[%s283 + $0x8] sm:$0xff] %vm920, %v919
      %v923 = vld [vmem:[%s288] sm:$0xff]
      %v924 = vld [vmem:[%s288 + $0x8] sm:$0xff]
      %v925 = vmul.f32 %v725, %v725
      %v926 = vmul.f32 %v727, %v727
      %v927 = vmul.f32 %v879, %v879
      %v928 = vmul.f32 %v881, %v881
      %v929 = vmul.f32 %v731, %v731
      %v930 = vmul.f32 %v733, %v733
      %v931 = vmul.f32 %v885, %v885
      %v932 = vmul.f32 %v887, %v887
      %v933 = vadd.f32 %v925, %v926
      %v934 = vadd.f32 %v933, %v927
      %v935 = vadd.f32 %v934, %v928
      %936 = vadd.xlane.f32.xlu0 %v935
      %v937 = vpop.xlane.xlu0 %936
      %v938 = vadd.f32 %v929, %v930
      %v939 = vadd.f32 %v938, %v931
      %v940 = vadd.f32 %v939, %v932
      %941 = vadd.xlane.f32.xlu0 %v940
      %v942 = vpop.xlane.xlu0 %941
      %v943 = vadd.f32 %v923, %v937
      %v944 = vadd.f32 %v924, %v942
      %945 = vst.msk [vmem:[%s288] sm:$0xff] %vm920, %v943
      %946 = vst.msk [vmem:[%s288 + $0x8] sm:$0xff] %vm920, %v944
      %s947 = smul.u32 4, %s22
      %p948 = scmp.lt.s32.totalorder %s21, 1
      %s949 = scalar_select %p948, %s21, 1
      %p950 = scmp.lt.s32.totalorder %s947, 3
      %s951 = scalar_select %p950, %s947, 3
      %s952 = smul.addr %s949, 8
      %s953 = sadd.s32 %s951, %s952
      %s954 = smul.addr %s953, 8
      %s955 = scalar_lea.vmem %s3, %s954
      %p956 = scmp.lt.s32.totalorder %s21, 1
      %s957 = scalar_select %p956, %s21, 1
      %s958 = smul.addr %s957, 2
      %s959 = smul.addr %s958, 8
      %s960 = scalar_lea.vmem %s4, %s959
      %p961 = scmp.lt.s32.totalorder %s21, 1
      %s962 = scalar_select %p961, %s21, 1
      %s963 = smul.addr %s962, 2
      %s964 = smul.addr %s963, 8
      %s965 = scalar_lea.vmem %s5, %s964
      // Predicated region
      $region37: #{multiscale_block.2} parent=31 // pred_check
        %p966 = pneg %p119
      $region38: #{multiscale_block.2} parent=31 // pred_check_branch
        %968 = sbr.rel (%p966) target = $region40
      $region39: #{multiscale_block.2} parent=31 // pred_region
        %s969 = smul.u32 4, %s22
      $region40: #{multiscale_block.2} parent=31 // pred_fallthru
        _
      // Predicated region
      $region41: #{multiscale_block.2} parent=31 // pred_check
        %p970 = pneg %p145
      $region42: #{multiscale_block.2} parent=31 // pred_check_branch
        %972 = sbr.rel (%p970) target = $region44
      $region43: #{multiscale_block.2} parent=31 // pred_region
        _
      $region44: #{multiscale_block.2} parent=31 // pred_fallthru
        _
      // Predicated region
      $region45: #{multiscale_block.2} parent=31 // pred_check
        %p973 = pneg %p171
      $region46: #{multiscale_block.2} parent=31 // pred_check_branch
        %975 = sbr.rel (%p973) target = $region48
      $region47: #{multiscale_block.2} parent=31 // pred_region
        _
      $region48: #{multiscale_block.2} parent=31 // pred_fallthru
        _
    $region32: #{multiscale_block.2} parent=5 // pred_fallthru
      _
    %p976 = scmp.le.s32.totalorder 2, %s12
    // Predicated region
    $region49: #{multiscale_block.2} parent=5 // pred_check
      %p977 = pneg %p976
    $region50: #{multiscale_block.2} parent=5 // pred_check_branch
      %979 = sbr.rel (%p977) target = $region52
    $region51: #{multiscale_block.2} parent=5 // pred_region
      %s980 = ssub.s32 %s12, 2
      // Predicated region
      $region53: #{multiscale_block.2} parent=51 // pred_check
        %p981 = pneg %p125
      $region54: #{multiscale_block.2} parent=51 // pred_check_branch
        %983 = sbr.rel (%p981) target = $region56
      $region55: #{multiscale_block.2} parent=51 // pred_region
        %s984 = smul.u32 4, %s24
        %p985 = scmp.lt.s32.totalorder %s23, 1
        %s986 = scalar_select %p985, %s23, 1
        %p987 = scmp.lt.s32.totalorder %s984, 3
        %s988 = scalar_select %p987, %s984, 3
        %s989 = smul.addr %s986, 8
        %s990 = sadd.s32 %s988, %s989
        %s991 = smul.addr %s990, 8
        %s992 = scalar_lea.vmem %s3, %s991
      $region56: #{multiscale_block.2} parent=51 // pred_fallthru
        _
      // Predicated region
      $region57: #{multiscale_block.2} parent=51 // pred_check
        %p993 = pneg %p151
      $region58: #{multiscale_block.2} parent=51 // pred_check_branch
        %995 = sbr.rel (%p993) target = $region60
      $region59: #{multiscale_block.2} parent=51 // pred_region
        %p996 = scmp.lt.s32.totalorder %s23, 1
        %s997 = scalar_select %p996, %s23, 1
        %s998 = smul.addr %s997, 2
        %s999 = smul.addr %s998, 8
        %s1000 = scalar_lea.vmem %s4, %s999
      $region60: #{multiscale_block.2} parent=51 // pred_fallthru
        _
      // Predicated region
      $region61: #{multiscale_block.2} parent=51 // pred_check
        %p1001 = pneg %p177
      $region62: #{multiscale_block.2} parent=51 // pred_check_branch
        %1003 = sbr.rel (%p1001) target = $region64
      $region63: #{multiscale_block.2} parent=51 // pred_region
        %p1004 = scmp.lt.s32.totalorder %s23, 1
        %s1005 = scalar_select %p1004, %s23, 1
        %s1006 = smul.addr %s1005, 2
        %s1007 = smul.addr %s1006, 8
        %s1008 = scalar_lea.vmem %s5, %s1007
      $region64: #{multiscale_block.2} parent=51 // pred_fallthru
        _
    $region52: #{multiscale_block.2} parent=5 // pred_fallthru
      _
  $region6: #{multiscale_block.2} parent=0 // loop_footer
    %s16 = sadd.s32 1, %s12
  $region7: #{multiscale_block.2} parent=0 // loop_footer_branch
    %11 = sbr.rel target = $region3
  $region8: #{multiscale_block.2} parent=0 // loop_exit
    _

// kernel: multiscale_block.3
$region0: #{multiscale_block.3}
  #allocation0 [shape = 'u32[]', space=smem, size = 0x4, offset = 0x4, fixed_abs, tag = 'smem constant byte address 0x4 - core index']
  #allocation1 [shape = 'u32[144,128]{1,0:T(1,128)}', space=vmem, size = 0x12000, scoped, tag = 'internal scratch']
  %s0 = inlined_call_operand.vmem [shape: f32[2,16,512], index: 0, kind: input, shape index: {}]
  %s1 = inlined_call_operand.vmem [shape: f32[2,16,1], index: 1, kind: input, shape index: {}]
  %s2 = inlined_call_operand.vmem [shape: f32[2,16,1], index: 2, kind: input, shape index: {}]
  %s3 = inlined_call_operand.vmem [shape: f32[2,16,512], index: 3, kind: output, shape index: {}]
  %s4 = sld [smem:[#allocation0]]
  $region45: #{multiscale_block.3} parent=0
    _
  %s6 = ssub.s32 1, %s4
  %s7 = scalar_select 0, %s6, %s4
  loop: start=0, step=1, limit=4
  $region2: #{multiscale_block.3} parent=0 // loop_pre_header
    _
  $region3: #{multiscale_block.3} parent=0 // loop_header
    %s9 = sphi 0, %s13
    %p10 = scmp.ge.s32.totalorder %s9, 4
    %s16 = sphi 0, %s28
    %s17 = sphi 0, %s24
    %s18 = sphi 0, %s16
    %s19 = sphi 0, %s17
    %s20 = sphi 0, %s18
    %s21 = sphi 0, %s19
    %s33 = sphi 0, %s35
    %s36 = sphi 0, %s33
    %s37 = sphi 0, %s36
    %s53 = sphi 0, %s37
    %s59 = sphi 0, %s61
    %s62 = sphi 0, %s59
    %s63 = sphi 0, %s62
    %s79 = sphi 0, %s63
    %s85 = sphi 0, %s87
    %s88 = sphi 0, %s85
    %s89 = sphi 0, %s88
    %s105 = sphi 0, %s89
    %s113 = sphi 0, %s115
    %s116 = sphi 0, %s113
    %s117 = sphi 0, %s116
    %s133 = sphi 0, %s117
  $region4: #{multiscale_block.3} parent=0 // loop_header_branch
    %12 = sbr.rel (%p10) target = $region8
  $region5: #{multiscale_block.3} parent=0 // loop_body
    %s14 = ssub.s32 %s9, 1
    %s15 = ssub.s32 %s9, 2
    %s22 = sadd.s32 1, %s17
    %p23 = scmp.ge.s32.totalorder %s22, 1
    %s24 = scalar_select %p23, 0, %s22
    %s25 = sadd.s32 1, %s16
    %s26 = scalar_select %p23, %s25, %s16
    %p27 = scmp.ge.s32.totalorder %s26, 2
    %s28 = scalar_select %p27, 0, %s26
    %s29 = ssub.s32 %s16, %s28
    %s30 = ssub.s32 %s17, %s24
    %s31 = sor.u32 %s29, %s30
    %p32 = scmp.eq.s32.totalorder %s31, 0
    %s34 = sadd.s32 %s33, 1
    %s35 = scalar_select %p32, %s33, %s34
    %p38 = pneg %p32
    %p39 = scmp.eq.s32.totalorder %s9, 1
    %p40 = por %p38, %p39
    %p41 = scmp.ne.s32.totalorder %s33, %s36
    %p42 = scmp.eq.s32.totalorder %s9, 0
    %p43 = por %p41, %p42
    %p44 = scmp.ne.s32.totalorder %s33, %s36
    %p45 = scmp.eq.s32.totalorder %s14, 1
    %p46 = por %p44, %p45
    %p47 = scmp.ne.s32.totalorder %s36, %s37
    %p48 = scmp.eq.s32.totalorder %s14, 0
    %p49 = por %p47, %p48
    %p50 = scmp.ne.s32.totalorder %s36, %s37
    %p51 = scmp.eq.s32.totalorder %s15, 1
    %p52 = por %p50, %p51
    %p54 = scmp.ne.s32.totalorder %s37, %s53
    %p55 = scmp.eq.s32.totalorder %s15, 0
    %p56 = por %p54, %p55
    %s57 = ssub.s32 %s16, %s28
    %p58 = scmp.eq.s32.totalorder %s57, 0
    %s60 = sadd.s32 %s59, 1
    %s61 = scalar_select %p58, %s59, %s60
    %p64 = pneg %p58
    %p65 = scmp.eq.s32.totalorder %s9, 1
    %p66 = por %p64, %p65
    %p67 = scmp.ne.s32.totalorder %s59, %s62
    %p68 = scmp.eq.s32.totalorder %s9, 0
    %p69 = por %p67, %p68
    %p70 = scmp.ne.s32.totalorder %s59, %s62
    %p71 = scmp.eq.s32.totalorder %s14, 1
    %p72 = por %p70, %p71
    %p73 = scmp.ne.s32.totalorder %s62, %s63
    %p74 = scmp.eq.s32.totalorder %s14, 0
    %p75 = por %p73, %p74
    %p76 = scmp.ne.s32.totalorder %s62, %s63
    %p77 = scmp.eq.s32.totalorder %s15, 1
    %p78 = por %p76, %p77
    %p80 = scmp.ne.s32.totalorder %s63, %s79
    %p81 = scmp.eq.s32.totalorder %s15, 0
    %p82 = por %p80, %p81
    %s83 = ssub.s32 %s16, %s28
    %p84 = scmp.eq.s32.totalorder %s83, 0
    %s86 = sadd.s32 %s85, 1
    %s87 = scalar_select %p84, %s85, %s86
    %p90 = pneg %p84
    %p91 = scmp.eq.s32.totalorder %s9, 1
    %p92 = por %p90, %p91
    %p93 = scmp.ne.s32.totalorder %s85, %s88
    %p94 = scmp.eq.s32.totalorder %s9, 0
    %p95 = por %p93, %p94
    %p96 = scmp.ne.s32.totalorder %s85, %s88
    %p97 = scmp.eq.s32.totalorder %s14, 1
    %p98 = por %p96, %p97
    %p99 = scmp.ne.s32.totalorder %s88, %s89
    %p100 = scmp.eq.s32.totalorder %s14, 0
    %p101 = por %p99, %p100
    %p102 = scmp.ne.s32.totalorder %s88, %s89
    %p103 = scmp.eq.s32.totalorder %s15, 1
    %p104 = por %p102, %p103
    %p106 = scmp.ne.s32.totalorder %s89, %s105
    %p107 = scmp.eq.s32.totalorder %s15, 0
    %p108 = por %p106, %p107
    %s109 = ssub.s32 %s16, %s28
    %s110 = ssub.s32 %s17, %s24
    %s111 = sor.u32 %s109, %s110
    %p112 = scmp.eq.s32.totalorder %s111, 0
    %s114 = sadd.s32 %s113, 1
    %s115 = scalar_select %p112, %s113, %s114
    %p118 = pneg %p112
    %p119 = scmp.eq.s32.totalorder %s9, 1
    %p120 = por %p118, %p119
    %p121 = scmp.ne.s32.totalorder %s113, %s116
    %p122 = scmp.eq.s32.totalorder %s9, 0
    %p123 = por %p121, %p122
    %p124 = scmp.ne.s32.totalorder %s113, %s116
    %p125 = scmp.eq.s32.totalorder %s14, 1
    %p126 = por %p124, %p125
    %p127 = scmp.ne.s32.totalorder %s116, %s117
    %p128 = scmp.eq.s32.totalorder %s14, 0
    %p129 = por %p127, %p128
    %p130 = scmp.ne.s32.totalorder %s116, %s117
    %p131 = scmp.eq.s32.totalorder %s15, 1
    %p132 = por %p130, %p131
    %p134 = scmp.ne.s32.totalorder %s117, %s133
    %p135 = scmp.eq.s32.totalorder %s15, 0
    %p136 = por %p134, %p135
    %p137 = scmp.le.s32.totalorder 1, %s9
    %p138 = scmp.lt.s32.totalorder %s9, 3
    %p139 = pnand %p137, %p138
    %p140 = pneg %p139
    // Predicated region
    $region9: #{multiscale_block.3} parent=5 // pred_check
      _
    $region10: #{multiscale_block.3} parent=5 // pred_check_branch
      %142 = sbr.rel (%p139) target = $region12
    $region11: #{multiscale_block.3} parent=5 // pred_region
      %s143 = ssub.s32 %s9, 1
    $region12: #{multiscale_block.3} parent=5 // pred_fallthru
      _
    %p144 = scmp.lt.s32.totalorder %s9, 2
    // Predicated region
    $region13: #{multiscale_block.3} parent=5 // pred_check
      %p145 = pneg %p144
    $region14: #{multiscale_block.3} parent=5 // pred_check_branch
      %147 = sbr.rel (%p145) target = $region16
    $region15: #{multiscale_block.3} parent=5 // pred_region
      // Predicated region
      $region17: #{multiscale_block.3} parent=15 // pred_check
        %p148 = pneg %p43
      $region18: #{multiscale_block.3} parent=15 // pred_check_branch
        %150 = sbr.rel (%p148) target = $region20
      $region19: #{multiscale_block.3} parent=15 // pred_region
        %s151 = smul.u32 4, %s17
        %p152 = scmp.lt.s32.totalorder %s16, 1
        %s153 = scalar_select %p152, %s16, 1
        %p154 = scmp.lt.s32.totalorder %s151, 3
        %s155 = scalar_select %p154, %s151, 3
        %s156 = smul.addr %s153, 8
        %s157 = sadd.s32 %s155, %s156
        %s158 = smul.addr %s157, 8
        %s159 = scalar_lea.vmem %s0, %s158
        %s160 = smul.u32 4, %s17
      $region20: #{multiscale_block.3} parent=15 // pred_fallthru
        _
      // Predicated region
      $region21: #{multiscale_block.3} parent=15 // pred_check
        %p161 = pneg %p69
      $region22: #{multiscale_block.3} parent=15 // pred_check_branch
        %163 = sbr.rel (%p161) target = $region24
      $region23: #{multiscale_block.3} parent=15 // pred_region
        %p164 = scmp.lt.s32.totalorder %s16, 1
        %s165 = scalar_select %p164, %s16, 1
        %s166 = smul.addr %s165, 2
        %s167 = smul.addr %s166, 8
        %s168 = scalar_lea.vmem %s1, %s167
      $region24: #{multiscale_block.3} parent=15 // pred_fallthru
        _
      // Predicated region
      $region25: #{multiscale_block.3} parent=15 // pred_check
        %p169 = pneg %p95
      $region26: #{multiscale_block.3} parent=15 // pred_check_branch
        %171 = sbr.rel (%p169) target = $region28
      $region27: #{multiscale_block.3} parent=15 // pred_region
        %p172 = scmp.lt.s32.totalorder %s16, 1
        %s173 = scalar_select %p172, %s16, 1
        %s174 = smul.addr %s173, 2
        %s175 = smul.addr %s174, 8
        %s176 = scalar_lea.vmem %s2, %s175
      $region28: #{multiscale_block.3} parent=15 // pred_fallthru
        _
    $region16: #{multiscale_block.3} parent=5 // pred_fallthru
      _
    %p177 = scmp.le.s32.totalorder 1, %s9
    %p178 = scmp.lt.s32.totalorder %s9, 3
    %p179 = pnand %p177, %p178
    %p180 = pneg %p179
    // Predicated region
    $region29: #{multiscale_block.3} parent=5 // pred_check
      _
    $region30: #{multiscale_block.3} parent=5 // pred_check_branch
      %182 = sbr.rel (%p179) target = $region32
    $region31: #{multiscale_block.3} parent=5 // pred_region
      %s183 = ssub.s32 %s9, 1
      %s184 = smul.u32 4, %s19
      %p185 = scmp.lt.s32.totalorder %s18, 1
      %s186 = scalar_select %p185, %s18, 1
      %p187 = scmp.lt.s32.totalorder %s184, 3
      %s188 = scalar_select %p187, %s184, 3
      %s189 = smul.addr %s186, 8
      %s190 = sadd.s32 %s188, %s189
      %s191 = smul.addr %s190, 8
      %s192 = scalar_lea.vmem %s0, %s191
      %p193 = pneg %p49
      %p194 = pneg %p46
      %p195 = scmp.lt.s32.totalorder %s18, 1
      %s196 = scalar_select %p195, %s18, 1
      %s197 = smul.addr %s196, 2
      %s198 = smul.addr %s197, 8
      %s199 = scalar_lea.vmem %s1, %s198
      %p200 = pneg %p75
      %p201 = pneg %p72
      %p202 = scmp.lt.s32.totalorder %s18, 1
      %s203 = scalar_select %p202, %s18, 1
      %s204 = smul.addr %s203, 2
      %s205 = smul.addr %s204, 8
      %s206 = scalar_lea.vmem %s2, %s205
      %p207 = pneg %p101
      %p208 = pneg %p98
      %p209 = pneg %p129
      %p210 = pneg %p126
      %s211 = smul.u32 4, %s19
      %p212 = scmp.lt.s32.totalorder %s18, 1
      %s213 = scalar_select %p212, %s18, 1
      %p214 = scmp.lt.s32.totalorder %s211, 3
      %s215 = scalar_select %p214, %s211, 3
      %s216 = smul.addr %s213, 8
      %s217 = sadd.s32 %s215, %s216
      %s218 = smul.addr %s217, 8
      %s219 = scalar_lea.vmem %s3, %s218
      %s220 = smul.u32 4, %s19
      %p221 = scmp.lt.s32.totalorder %s18, 1
      %s222 = scalar_select %p221, %s18, 1
      %p223 = scmp.lt.s32.totalorder %s220, 3
      %s224 = scalar_select %p223, %s220, 3
      %s225 = smul.addr %s222, 8
      %s226 = sadd.s32 %s224, %s225
      %s227 = smul.addr %s226, 8
      %s228 = scalar_lea.vmem %s0, %s227
      %s229 = smul.u32 4, %s19
      %p230 = scmp.lt.s32.totalorder %s18, 1
      %s231 = scalar_select %p230, %s18, 1
      %s232 = smul.addr %s231, 2
      %s233 = smul.addr %s232, 8
      %s234 = scalar_lea.vmem %s1, %s233
      %p235 = scmp.lt.s32.totalorder %s18, 1
      %s236 = scalar_select %p235, %s18, 1
      %s237 = smul.addr %s236, 2
      %s238 = smul.addr %s237, 8
      %s239 = scalar_lea.vmem %s2, %s238
      %s240 = smul.u32 4, %s19
      %p241 = scmp.lt.s32.totalorder %s18, 1
      %s242 = scalar_select %p241, %s18, 1
      %p243 = scmp.lt.s32.totalorder %s240, 3
      %s244 = scalar_select %p243, %s240, 3
      %s245 = smul.addr %s242, 8
      %s246 = sadd.s32 %s244, %s245
      %s247 = smul.addr %s246, 8
      %s248 = scalar_lea.vmem %s3, %s247
      %s249 = smul.u32 4, %s19
      %v250 = vld [vmem:[%s234] sm:$0xff]
      %v251 = vld [vmem:[%s234 + $0x8] sm:$0xff]
      %v252 = vmul.f32 %v250, 0.001953125
      %v253 = vmul.f32 %v251, 0.001953125
      %v254 = vld [vmem:[%s239] sm:$0xff]
      %v255 = vld [vmem:[%s239 + $0x8] sm:$0xff]
      %v256 = vmul.f32 %v254, 0.001953125
      %v257 = vmul.f32 %v255, 0.001953125
      %v258 = vmul.f32 %v252, %v252
      %v259 = vmul.f32 %v253, %v253
      %v260 = vsub.f32 %v256, %v258
      %v261 = vsub.f32 %v257, %v259
      %v262 = vmax.f32 %v260, 0.0
      %v263 = vmax.f32 %v261, 0.0
      %v264 = vadd.f32 %v262, 1e-05
      %v265 = vadd.f32 %v263, 1e-05
      %v266 = vrsqrt.pop %v264
      %v267 = vrsqrt.pop %v265
      %v268 = vld [vmem:[%s228] sm:$0xff]
      %v269 = vld [vmem:[%s228 + $0x8] sm:$0xff]
      %v270 = vld [vmem:[%s228 + $0x10] sm:$0xff]
      %v271 = vld [vmem:[%s228 + $0x18] sm:$0xff]
      %v272 = vld [vmem:[%s228 + $0x20] sm:$0xff]
      %v273 = vld [vmem:[%s228 + $0x28] sm:$0xff]
      %v274 = vld [vmem:[%s228 + $0x30] sm:$0xff]
      %v275 = vld [vmem:[%s228 + $0x38] sm:$0xff]
      %277 = vset.pattern.permute.xlu0 0
      %278 = vperm.xlu0 %277, %v252
      %v279 = vpop.permute.xlu0 %278
      %282 = vset.pattern.permute.xlu0 0
      %283 = vperm.xlu0 %282, %v253
      %v284 = vpop.permute.xlu0 %283
      %v286 = vsub.f32 %v268, %v279
      %v287 = vsub.f32 %v269, %v279
      %v288 = vsub.f32 %v270, %v279
      %v289 = vsub.f32 %v271, %v279
      %v290 = vsub.f32 %v272, %v284
      %v291 = vsub.f32 %v273, %v284
      %v292 = vsub.f32 %v274, %v284
      %v293 = vsub.f32 %v275, %v284
      %295 = vset.pattern.permute.xlu0 0
      %296 = vperm.xlu0 %295, %v266
      %v297 = vpop.permute.xlu0 %296
      %300 = vset.pattern.permute.xlu0 0
      %301 = vperm.xlu0 %300, %v267
      %v302 = vpop.permute.xlu0 %301
      %v304 = vmul.f32 %v286, %v297
      %v305 = vmul.f32 %v287, %v297
      %v306 = vmul.f32 %v288, %v297
      %v307 = vmul.f32 %v289, %v297
      %v308 = vmul.f32 %v290, %v302
      %v309 = vmul.f32 %v291, %v302
      %v310 = vmul.f32 %v292, %v302
      %v311 = vmul.f32 %v293, %v302
      %vm312 = vcmp.ge.f32.partialorder %v304, 0.0
      %vm313 = vcmp.ge.f32.partialorder %v305, 0.0
      %vm314 = vcmp.ge.f32.partialorder %v306, 0.0
      %vm315 = vcmp.ge.f32.partialorder %v307, 0.0
      %vm316 = vcmp.ge.f32.partialorder %v308, 0.0
      %vm317 = vcmp.ge.f32.partialorder %v309, 0.0
      %vm318 = vcmp.ge.f32.partialorder %v310, 0.0
      %vm319 = vcmp.ge.f32.partialorder %v311, 0.0
      %v320 = vmul.f32 %v304, 0.01
      %v321 = vmul.f32 %v305, 0.01
      %v322 = vmul.f32 %v306, 0.01
      %v323 = vmul.f32 %v307, 0.01
      %v324 = vmul.f32 %v308, 0.01
      %v325 = vmul.f32 %v309, 0.01
      %v326 = vmul.f32 %v310, 0.01
      %v327 = vmul.f32 %v311, 0.01
      %v328 = vsel %vm312, %v304, %v320
      %v329 = vsel %vm313, %v305, %v321
      %v330 = vsel %vm314, %v306, %v322
      %v331 = vsel %vm315, %v307, %v323
      %v332 = vsel %vm316, %v308, %v324
      %v333 = vsel %vm317, %v309, %v325
      %v334 = vsel %vm318, %v310, %v326
      %v335 = vsel %vm319, %v311, %v327
      %336 = vst [vmem:[%s248] sm:$0xff] %v328
      %337 = vst [vmem:[%s248 + $0x8] sm:$0xff] %v329
      %338 = vst [vmem:[%s248 + $0x10] sm:$0xff] %v330
      %339 = vst [vmem:[%s248 + $0x18] sm:$0xff] %v331
      %340 = vst [vmem:[%s248 + $0x20] sm:$0xff] %v332
      %341 = vst [vmem:[%s248 + $0x28] sm:$0xff] %v333
      %342 = vst [vmem:[%s248 + $0x30] sm:$0xff] %v334
      %343 = vst [vmem:[%s248 + $0x38] sm:$0xff] %v335
      %s344 = smul.u32 4, %s19
      %p345 = scmp.lt.s32.totalorder %s18, 1
      %s346 = scalar_select %p345, %s18, 1
      %p347 = scmp.lt.s32.totalorder %s344, 3
      %s348 = scalar_select %p347, %s344, 3
      %s349 = smul.addr %s346, 8
      %s350 = sadd.s32 %s348, %s349
      %s351 = smul.addr %s350, 8
      %s352 = scalar_lea.vmem %s3, %s351
      // Predicated region
      $region33: #{multiscale_block.3} parent=31 // pred_check
        %p353 = pneg %p126
      $region34: #{multiscale_block.3} parent=31 // pred_check_branch
        %355 = sbr.rel (%p353) target = $region36
      $region35: #{multiscale_block.3} parent=31 // pred_region
        %s356 = smul.u32 4, %s19
      $region36: #{multiscale_block.3} parent=31 // pred_fallthru
        _
    $region32: #{multiscale_block.3} parent=5 // pred_fallthru
      _
    %p357 = scmp.le.s32.totalorder 2, %s9
    // Predicated region
    $region37: #{multiscale_block.3} parent=5 // pred_check
      %p358 = pneg %p357
    $region38: #{multiscale_block.3} parent=5 // pred_check_branch
      %360 = sbr.rel (%p358) target = $region40
    $region39: #{multiscale_block.3} parent=5 // pred_region
      %s361 = ssub.s32 %s9, 2
      // Predicated region
      $region41: #{multiscale_block.3} parent=39 // pred_check
        %p362 = pneg %p132
      $region42: #{multiscale_block.3} parent=39 // pred_check_branch
        %364 = sbr.rel (%p362) target = $region44
      $region43: #{multiscale_block.3} parent=39 // pred_region
        %s365 = smul.u32 4, %s21
        %p366 = scmp.lt.s32.totalorder %s20, 1
        %s367 = scalar_select %p366, %s20, 1
        %p368 = scmp.lt.s32.totalorder %s365, 3
        %s369 = scalar_select %p368, %s365, 3
        %s370 = smul.addr %s367, 8
        %s371 = sadd.s32 %s369, %s370
        %s372 = smul.addr %s371, 8
        %s373 = scalar_lea.vmem %s3, %s372
      $region44: #{multiscale_block.3} parent=39 // pred_fallthru
        _
    $region40: #{multiscale_block.3} parent=5 // pred_fallthru
      _
  $region6: #{multiscale_block.3} parent=0 // loop_footer
    %s13 = sadd.s32 1, %s9
  $region7: #{multiscale_block.3} parent=0 // loop_footer_branch
    %8 = sbr.rel target = $region3
  $region8: #{multiscale_block.3} parent=0 // loop_exit
    _

</llo_original>
